<compile_context>
chip_gen: v7x
topology: tpu7x:2x2x1
jax: 0.10.0
libtpu: 0.0.40
codegen_flags: <defaults>
</compile_context>

<pallas_src>
import math
import jax
import jax.numpy as jnp
from jax.experimental import pallas as pl
from jax.experimental.pallas import tpu as pltpu

B = 2
C = 3
IMG = 16
PATCH = 8
D = 32
H = 4
DH = D // H
MLP = 64
LAYERS = 2
P = (IMG // PATCH) ** 2      # 4 patches per image
S = P + 1                    # 5 tokens (CLS + patches)
S_PAD = 8                    # pad token rows to the f32 sublane multiple
CPP = C * PATCH * PATCH      # 192
EPS = 1e-12                  # HF ViT layer_norm_eps


def _layernorm(x, g, b):
    mu = jnp.mean(x, axis=-1, keepdims=True)
    var = jnp.mean((x - mu) ** 2, axis=-1, keepdims=True)
    return (x - mu) * jax.lax.rsqrt(var + EPS) * g + b


# ------------------------------ fused kernel --------------------------------

def vit_kernel(xp_ref, wp_ref, bp_ref, cls_ref, pos_ref,
               g1_ref, be1_ref, wqkv_ref, bqkv_ref, wo_ref, bo_ref,
               g2_ref, be2_ref, w1_ref, bm1_ref, w2_ref, bm2_ref,
               gf_ref, bf_ref,
               o_ref,
               h_ref, ctx_ref):
    """One grid point = (image b, encoder layer l)."""
    f32, bf16 = jnp.float32, jnp.bfloat16
    l = pl.program_id(1)

    # ---- layer 0 only: patch embed + CLS + positional embedding ------------
    @pl.when(l == 0)
    def _embed():
        emb = jnp.dot(xp_ref[...], wp_ref[...],
                      preferred_element_type=f32) + bp_ref[...]        # (P, D)
        h_ref[...] = jnp.zeros_like(h_ref)                              # pad rows
        h_ref[0:1, :] = cls_ref[...] + pos_ref[0:1, :]                  # CLS row
        h_ref[1:S, :] = emb + pos_ref[1:S, :]                           # patches

    h = h_ref[...]                                                      # (S_PAD, D) f32

    # Additive key mask for the S -> S_PAD padding, generated in-kernel
    # (nothing DMA'd; the cross-image mask of the old flat-token design is gone).
    key_ids = jax.lax.broadcasted_iota(jnp.int32, (1, S_PAD), 1)
    key_mask = jnp.where(key_ids < S, 0.0, -1e30).astype(f32)

    scale = 1.0 / math.sqrt(DH)

    # ---- attention block ----------------------------------------------------
    xn = _layernorm(h, g1_ref[...], be1_ref[...])
    qkv = jnp.dot(xn.astype(bf16), wqkv_ref[...],
                  preferred_element_type=f32) + bqkv_ref[...]           # (S_PAD, 3D)
    q = qkv[:, 0 * D:1 * D] * scale
    k = qkv[:, 1 * D:2 * D]
    v = qkv[:, 2 * D:3 * D]

    for hh in range(H):                                                 # static head unroll
        sl = slice(hh * DH, (hh + 1) * DH)
        s = jax.lax.dot_general(q[:, sl].astype(bf16), k[:, sl].astype(bf16),
                                (((1,), (1,)), ((), ())),
                                preferred_element_type=f32)             # (S_PAD, S_PAD)
        s = s + key_mask
        s = s - jnp.max(s, axis=-1, keepdims=True)
        p = jnp.exp(s)
        p = p * pl.reciprocal(jnp.sum(p, axis=-1, keepdims=True), approx=False)
        # Write this head's context into its lane slice; the head "concat" is
        # just these stores, followed by a single K=D output projection.
        ctx_ref[:, sl] = jnp.dot(p.astype(bf16), v[:, sl].astype(bf16),
                                 preferred_element_type=f32)

    h = h + jnp.dot(ctx_ref[...].astype(bf16), wo_ref[...],
                    preferred_element_type=f32) + bo_ref[...]

    # ---- MLP block -----------------------------------------------------------
    xn2 = _layernorm(h, g2_ref[...], be2_ref[...])
    m = jnp.dot(xn2.astype(bf16), w1_ref[...],
                preferred_element_type=f32) + bm1_ref[...]
    # TODO(synk): HF ViT uses exact (erf) GELU; tanh approx kept for robust lowering.
    m = jax.nn.gelu(m, approximate=True)
    h = h + jnp.dot(m.astype(bf16), w2_ref[...],
                    preferred_element_type=f32) + bm2_ref[...]
    h_ref[...] = h

    # ---- final LayerNorm on the CLS row, emitted on the last layer ----------
    @pl.when(l == LAYERS - 1)
    def _final():
        o_ref[...] = _layernorm(h[0:1, :], gf_ref[...], bf_ref[...])


# ------------------------------- wrapper -------------------------------------

def vit_img_feat(x, params):
    """x: [B, C, IMG, IMG] (NCHW). Returns layernormed CLS features [B, D]."""
    bf16 = jnp.bfloat16

    # Patchify: NCHW -> [B, P, C*p*p] rows, (C, ph, pw) flat order so the
    # stride==kernel Conv2d becomes a plain matmul inside the kernel.
    xp = x.reshape(B, C, IMG // PATCH, PATCH, IMG // PATCH, PATCH)
    xp = xp.transpose(0, 2, 4, 1, 3, 5).reshape(B, P, CPP).astype(bf16)
    # TODO(synk): at 224x224 scale, fold this patchify into the input
    # BlockSpec/index_map instead of materializing a transposed copy in HBM.

    # Fuse Q/K/V projections into one (LAYERS, D, 3D) weight / (LAYERS, 1, 3D) bias.
    wqkv = jnp.concatenate([params["wq"], params["wk"], params["wv"]],
                           axis=-1).astype(bf16)
    bqkv = jnp.concatenate([params["bq"], params["bk"], params["bv"]], axis=-1)

    w_patch = params["w_patch"].astype(bf16)
    wo = params["wo"].astype(bf16)
    w1 = params["w1"].astype(bf16)
    w2 = params["w2"].astype(bf16)

    def const_spec(shape):
        return pl.BlockSpec(shape, lambda b, l: (0,) * len(shape))

    def per_layer(shape):
        return pl.BlockSpec((None,) + shape, lambda b, l: (l, 0, 0))

    in_specs = [
        pl.BlockSpec((None, P, CPP), lambda b, l: (b, 0, 0)),   # xp (per image)
        const_spec((CPP, D)),                                   # w_patch
        const_spec((1, D)),                                     # b_patch
        const_spec((1, D)),                                     # cls
        const_spec((S, D)),                                     # pos
        per_layer((1, D)),                                      # g1
        per_layer((1, D)),                                      # be1
        per_layer((D, 3 * D)),                                  # wqkv
        per_layer((1, 3 * D)),                                  # bqkv
        per_layer((D, D)),                                      # wo
        per_layer((1, D)),                                      # bo
        per_layer((1, D)),                                      # g2
        per_layer((1, D)),                                      # be2
        per_layer((D, MLP)),                                    # w1
        per_layer((1, MLP)),                                    # bm1
        per_layer((MLP, D)),                                    # w2
        per_layer((1, D)),                                      # bm2
        const_spec((1, D)),                                     # g_f
        const_spec((1, D)),                                     # b_f
    ]
    # Output kept 3-D so every block's last two dims equal the full array dims.
    out_specs = pl.BlockSpec((None, 1, D), lambda b, l: (b, 0, 0))

    grid_spec = pltpu.PrefetchScalarGridSpec(
        num_scalar_prefetch=0,
        grid=(B, LAYERS),
        in_specs=in_specs,
        out_specs=out_specs,
        scratch_shapes=[
            pltpu.VMEM((S_PAD, D), jnp.float32),   # hidden state (layer-resident)
            pltpu.VMEM((S_PAD, D), jnp.float32),   # multi-head context buffer
        ],
    )

    args = (xp, w_patch, params["b_patch"], params["cls"], params["pos"],
            params["g1"], params["be1"], wqkv, bqkv, wo, params["bo"],
            params["g2"], params["be2"], w1, params["bm1"], w2, params["bm2"],
            params["g_f"], params["b_f"])

    # Rough cost hints for XLA scheduling around the fused call.
    flops_per_img_layer = (2 * S * D * 3 * D            # fused qkv
                           + 4 * S * S * D              # scores + p@v
                           + 2 * S * D * D              # output projection
                           + 4 * S * D * MLP)           # mlp
    flops = B * (LAYERS * flops_per_img_layer + 2 * P * CPP * D)
    transcendentals = B * LAYERS * (H * S * S + S * MLP)
    bytes_accessed = sum(int(a.size) * a.dtype.itemsize for a in args) + B * D * 4

    out = pl.pallas_call(
        vit_kernel,
        out_shape=jax.ShapeDtypeStruct((B, 1, D), jnp.float32),
        grid_spec=grid_spec,
        compiler_params=pltpu.CompilerParams(
            dimension_semantics=("parallel", "arbitrary"),
            # Explicit VMEM budget (well under v7x's 32 MiB scoped default);
            # at ViT-base scale size this for 2 bf16 layer buffers + activations.
            vmem_limit_bytes=32 * 1024 * 1024,
        ),
        cost_estimate=pl.CostEstimate(flops=flops,
                                      transcendentals=transcendentals,
                                      bytes_accessed=bytes_accessed),
    )(*args)
    return out[:, 0, :]


# --------------------------- pure-JAX reference ------------------------------
# Same numeric policy as the kernel: bf16 matmul inputs, f32 accumulation,
# f32 LayerNorm/softmax.

def ref_forward(x, params):
    f32, bf16 = jnp.float32, jnp.bfloat16

    def mm(a, w):
        return jnp.dot(a.astype(bf16), w.astype(bf16), preferred_element_type=f32)

    xp = x.reshape(B, C, IMG // PATCH, PATCH, IMG // PATCH, PATCH)
    xp = xp.transpose(0, 2, 4, 1, 3, 5).reshape(B, P, CPP)
    scale = 1.0 / math.sqrt(DH)
    outs = []
    for b in range(B):
        emb = mm(xp[b], params["w_patch"]) + params["b_patch"]          # (P, D)
        h = jnp.concatenate([params["cls"], emb], axis=0) + params["pos"]
        for l in range(LAYERS):
            xn = _layernorm(h, params["g1"][l], params["be1"][l])
            q = (mm(xn, params["wq"][l]) + params["bq"][l]) * scale
            k = mm(xn, params["wk"][l]) + params["bk"][l]
            v = mm(xn, params["wv"][l]) + params["bv"][l]
            ctx = []
            for hh in range(H):
                sl = slice(hh * DH, (hh + 1) * DH)
                s = jnp.dot(q[:, sl].astype(bf16), k[:, sl].astype(bf16).T,
                            preferred_element_type=f32)
                p = jax.nn.softmax(s, axis=-1)
                ctx.append(jnp.dot(p.astype(bf16), v[:, sl].astype(bf16),
                                   preferred_element_type=f32))
            ctx = jnp.concatenate(ctx, axis=-1)
            h = h + mm(ctx, params["wo"][l]) + params["bo"][l]
            xn2 = _layernorm(h, params["g2"][l], params["be2"][l])
            m = jax.nn.gelu(mm(xn2, params["w1"][l]) + params["bm1"][l],
                            approximate=True)
            h = h + mm(m, params["w2"][l]) + params["bm2"][l]
        outs.append(_layernorm(h[0:1], params["g_f"], params["b_f"]))
    return jnp.concatenate(outs, axis=0)


# ------------------------------- params --------------------------------------
# TODO(synk): real use loads google/vit-base-patch16-224-in21k weights; random
# init here keeps the script self-contained.

def make_params(key):
    def nrm(k, shape, scale=0.02):
        return (scale * jax.random.normal(k, shape)).astype(jnp.float32)

    keys = jax.random.split(key, 4 + LAYERS * 12)
    ki = iter(keys)
    params = {
        "w_patch": nrm(next(ki), (CPP, D)),     # Conv2d(C, D, k=PATCH, s=PATCH) as matmul
        "b_patch": nrm(next(ki), (1, D)),
        "cls": nrm(next(ki), (1, D)),
        "pos": nrm(next(ki), (S, D)),
        "g_f": jnp.ones((1, D), jnp.float32),
        "b_f": jnp.zeros((1, D), jnp.float32),
    }
    per_layer = {n: [] for n in
                 ("g1", "be1", "wq", "bq", "wk", "bk", "wv", "bv",
                  "wo", "bo", "g2", "be2", "w1", "bm1", "w2", "bm2")}
    for _ in range(LAYERS):
        per_layer["g1"].append(jnp.ones((1, D), jnp.float32))
        per_layer["be1"].append(jnp.zeros((1, D), jnp.float32))
        per_layer["wq"].append(nrm(next(ki), (D, D)))
        per_layer["bq"].append(nrm(next(ki), (1, D)))
        per_layer["wk"].append(nrm(next(ki), (D, D)))
        per_layer["bk"].append(nrm(next(ki), (1, D)))
        per_layer["wv"].append(nrm(next(ki), (D, D)))
        per_layer["bv"].append(nrm(next(ki), (1, D)))
        per_layer["wo"].append(nrm(next(ki), (D, D)))
        per_layer["bo"].append(nrm(next(ki), (1, D)))
        per_layer["g2"].append(jnp.ones((1, D), jnp.float32))
        per_layer["be2"].append(jnp.zeros((1, D), jnp.float32))
        per_layer["w1"].append(nrm(next(ki), (D, MLP)))
        per_layer["bm1"].append(nrm(next(ki), (1, MLP)))
        per_layer["w2"].append(nrm(next(ki), (MLP, D)))
        per_layer["bm2"].append(nrm(next(ki), (1, D)))
    for n, v in per_layer.items():
        params[n] = jnp.stack(v, axis=0)          # stacked: [LAYERS, ...]
    return params


# -------------------------------- main ----------------------------------------

if __name__ == "__main__":
    root = jax.random.PRNGKey(0)
    k_img, k_par = jax.random.split(root)
    x = jax.random.normal(k_img, (B, C, IMG, IMG), dtype=jnp.float32)
    params = make_params(k_par)

    out = jax.block_until_ready(vit_img_feat(x, params))    # [B, D] CLS features
    ref = ref_forward(x, params)

    assert out.shape == (B, D)
    assert jnp.allclose(out, ref, rtol=2e-3, atol=2e-3), "mismatch vs JAX reference"

    print("KERNEL_OK")
</pallas_src>

<mosaic_0001>
module attributes {stable_mosaic.version = 11 : i64} {
  func.func @vit_kernel(%arg0: i32, %arg1: i32, %arg2: memref<1x4x192xbf16, #tpu.memory_space<vmem>>, %arg3: memref<192x32xbf16, #tpu.memory_space<vmem>>, %arg4: memref<1x32xf32, #tpu.memory_space<vmem>>, %arg5: memref<1x32xf32, #tpu.memory_space<vmem>>, %arg6: memref<5x32xf32, #tpu.memory_space<vmem>>, %arg7: memref<1x1x32xf32, #tpu.memory_space<vmem>>, %arg8: memref<1x1x32xf32, #tpu.memory_space<vmem>>, %arg9: memref<1x32x96xbf16, #tpu.memory_space<vmem>>, %arg10: memref<1x1x96xf32, #tpu.memory_space<vmem>>, %arg11: memref<1x32x32xbf16, #tpu.memory_space<vmem>>, %arg12: memref<1x1x32xf32, #tpu.memory_space<vmem>>, %arg13: memref<1x1x32xf32, #tpu.memory_space<vmem>>, %arg14: memref<1x1x32xf32, #tpu.memory_space<vmem>>, %arg15: memref<1x32x64xbf16, #tpu.memory_space<vmem>>, %arg16: memref<1x1x64xf32, #tpu.memory_space<vmem>>, %arg17: memref<1x64x32xbf16, #tpu.memory_space<vmem>>, %arg18: memref<1x1x32xf32, #tpu.memory_space<vmem>>, %arg19: memref<1x32xf32, #tpu.memory_space<vmem>>, %arg20: memref<1x32xf32, #tpu.memory_space<vmem>>, %arg21: memref<1x1x32xf32, #tpu.memory_space<vmem>>, %arg22: memref<8x32xf32, #tpu.memory_space<vmem>>, %arg23: memref<8x32xf32, #tpu.memory_space<vmem>>) attributes {dimension_semantics = [#tpu.dimension_semantics<parallel>, #tpu.dimension_semantics<arbitrary>], iteration_bounds = array<i64: 2, 2>, scalar_prefetch = 0 : i64, scratch_operands = 2 : i64, tpu.core_type = #tpu.core_type<tc>, window_params = [{transform_indices = @transform_0, window_bounds = array<i64: 1, 4, 192>}, {pipeline_mode = #tpu.pipeline_mode<synchronous>, transform_indices = @transform_1, window_bounds = array<i64: 192, 32>}, {pipeline_mode = #tpu.pipeline_mode<synchronous>, transform_indices = @transform_2, window_bounds = array<i64: 1, 32>}, {pipeline_mode = #tpu.pipeline_mode<synchronous>, transform_indices = @transform_3, window_bounds = array<i64: 1, 32>}, {pipeline_mode = #tpu.pipeline_mode<synchronous>, transform_indices = @transform_4, window_bounds = array<i64: 5, 32>}, {transform_indices = @transform_5, window_bounds = array<i64: 1, 1, 32>}, {transform_indices = @transform_6, window_bounds = array<i64: 1, 1, 32>}, {transform_indices = @transform_7, window_bounds = array<i64: 1, 32, 96>}, {transform_indices = @transform_8, window_bounds = array<i64: 1, 1, 96>}, {transform_indices = @transform_9, window_bounds = array<i64: 1, 32, 32>}, {transform_indices = @transform_10, window_bounds = array<i64: 1, 1, 32>}, {transform_indices = @transform_11, window_bounds = array<i64: 1, 1, 32>}, {transform_indices = @transform_12, window_bounds = array<i64: 1, 1, 32>}, {transform_indices = @transform_13, window_bounds = array<i64: 1, 32, 64>}, {transform_indices = @transform_14, window_bounds = array<i64: 1, 1, 64>}, {transform_indices = @transform_15, window_bounds = array<i64: 1, 64, 32>}, {transform_indices = @transform_16, window_bounds = array<i64: 1, 1, 32>}, {pipeline_mode = #tpu.pipeline_mode<synchronous>, transform_indices = @transform_17, window_bounds = array<i64: 1, 32>}, {pipeline_mode = #tpu.pipeline_mode<synchronous>, transform_indices = @transform_18, window_bounds = array<i64: 1, 32>}, {transform_indices = @transform_19, window_bounds = array<i64: 1, 1, 32>}]} {
    %c0_i32 = arith.constant 0 : i32
    %0 = arith.cmpi eq, %arg1, %c0_i32 : i32
    %1 = arith.extui %0 : i1 to i32
    %c0_i32_0 = arith.constant 0 : i32
    %2 = arith.cmpi ne, %1, %c0_i32_0 : i32
    scf.if %2 {
      %c0_84 = arith.constant 0 : index
      %c0_85 = arith.constant 0 : index
      %c0_86 = arith.constant 0 : index
      %207 = vector.load %arg2[%c0_84, %c0_85, %c0_86] : memref<1x4x192xbf16, #tpu.memory_space<vmem>>, vector<1x4x192xbf16>
      %208 = vector.shape_cast %207 : vector<1x4x192xbf16> to vector<4x192xbf16>
      %c0_87 = arith.constant 0 : index
      %c0_88 = arith.constant 0 : index
      %209 = vector.load %arg3[%c0_87, %c0_88] : memref<192x32xbf16, #tpu.memory_space<vmem>>, vector<192x32xbf16>
      %cst_89 = arith.constant dense<0.000000e+00> : vector<4x32xf32>
      %210 = tpu.matmul %208, %209, %cst_89 {dimension_numbers = #tpu.dot_dimension_numbers<[1], [0], [0], [1], [0, 0, 1, 1], [], []>} : vector<4x192xbf16>, vector<192x32xbf16>, vector<4x32xf32> -> vector<4x32xf32>
      %c0_90 = arith.constant 0 : index
      %c0_91 = arith.constant 0 : index
      %211 = vector.load %arg4[%c0_90, %c0_91] : memref<1x32xf32, #tpu.memory_space<vmem>>, vector<1x32xf32>
      %212 = vector.broadcast %211 : vector<1x32xf32> to vector<4x32xf32>
      %213 = arith.addf %210, %212 : vector<4x32xf32>
      %cst_92 = arith.constant 0.000000e+00 : f32
      %214 = vector.broadcast %cst_92 : f32 to vector<8x32xf32>
      %c0_93 = arith.constant 0 : index
      %c0_94 = arith.constant 0 : index
      %215 = vector.load %arg22[%c0_93, %c0_94] : memref<8x32xf32, #tpu.memory_space<vmem>>, vector<8x32xf32>
      tpu.vector_store %arg22[%c0_93, %c0_94], %214 {strides = array<i32>} : memref<8x32xf32, #tpu.memory_space<vmem>>, vector<8x32xf32>,
      %c0_95 = arith.constant 0 : index
      %c0_96 = arith.constant 0 : index
      %216 = vector.load %arg5[%c0_95, %c0_96] : memref<1x32xf32, #tpu.memory_space<vmem>>, vector<1x32xf32>
      %c0_97 = arith.constant 0 : index
      %c0_98 = arith.constant 0 : index
      %217 = vector.load %arg6[%c0_97, %c0_98] : memref<5x32xf32, #tpu.memory_space<vmem>>, vector<1x32xf32>
      %218 = arith.addf %216, %217 : vector<1x32xf32>
      %c0_99 = arith.constant 0 : index
      %c0_100 = arith.constant 0 : index
      %219 = vector.load %arg22[%c0_99, %c0_100] : memref<8x32xf32, #tpu.memory_space<vmem>>, vector<1x32xf32>
      tpu.vector_store %arg22[%c0_99, %c0_100], %218 {strides = array<i32>} : memref<8x32xf32, #tpu.memory_space<vmem>>, vector<1x32xf32>,
      %c1 = arith.constant 1 : index
      %c0_101 = arith.constant 0 : index
      %220 = vector.load %arg6[%c1, %c0_101] : memref<5x32xf32, #tpu.memory_space<vmem>>, vector<4x32xf32>
      %221 = arith.addf %213, %220 : vector<4x32xf32>
      %c1_102 = arith.constant 1 : index
      %c0_103 = arith.constant 0 : index
      %222 = vector.load %arg22[%c1_102, %c0_103] : memref<8x32xf32, #tpu.memory_space<vmem>>, vector<4x32xf32>
      tpu.vector_store %arg22[%c1_102, %c0_103], %221 {strides = array<i32>} : memref<8x32xf32, #tpu.memory_space<vmem>>, vector<4x32xf32>,
    } else {
    }
    %c0 = arith.constant 0 : index
    %c0_1 = arith.constant 0 : index
    %3 = vector.load %arg22[%c0, %c0_1] : memref<8x32xf32, #tpu.memory_space<vmem>>, vector<8x32xf32>
    %4 = tpu.iota {dimensions = array<i32: 1>} : vector<1x8xi32>
    %c5_i32 = arith.constant 5 : i32
    %5 = vector.broadcast %c5_i32 : i32 to vector<1x8xi32>
    %6 = arith.cmpi slt, %4, %5 : vector<1x8xi32>
    %cst = arith.constant 0.000000e+00 : f32
    %cst_2 = arith.constant -1.000000e+30 : f32
    %7 = vector.broadcast %cst : f32 to vector<1x8xf32>
    %8 = vector.broadcast %cst_2 : f32 to vector<1x8xf32>
    %9 = arith.select %6, %7, %8 : vector<1x8xi1>, vector<1x8xf32>
    %c0_3 = arith.constant 0 : index
    %c0_4 = arith.constant 0 : index
    %c0_5 = arith.constant 0 : index
    %10 = vector.load %arg7[%c0_3, %c0_4, %c0_5] : memref<1x1x32xf32, #tpu.memory_space<vmem>>, vector<1x1x32xf32>
    %11 = vector.shape_cast %10 : vector<1x1x32xf32> to vector<1x32xf32>
    %c0_6 = arith.constant 0 : index
    %c0_7 = arith.constant 0 : index
    %c0_8 = arith.constant 0 : index
    %12 = vector.load %arg8[%c0_6, %c0_7, %c0_8] : memref<1x1x32xf32, #tpu.memory_space<vmem>>, vector<1x1x32xf32>
    %13 = vector.shape_cast %12 : vector<1x1x32xf32> to vector<1x32xf32>
    %cst_9 = arith.constant dense<0.000000e+00> : vector<8xf32>
    %14 = vector.multi_reduction <add>, %3, %cst_9 [1] : vector<8x32xf32> to vector<8xf32>
    %15 = vector.shape_cast %14 : vector<8xf32> to vector<8x1xf32>
    %cst_10 = arith.constant 3.200000e+01 : f32
    %16 = vector.broadcast %cst_10 : f32 to vector<8x1xf32>
    %17 = arith.divf %15, %16 : vector<8x1xf32>
    %18 = vector.broadcast %17 : vector<8x1xf32> to vector<8x32xf32>
    %19 = arith.subf %3, %18 : vector<8x32xf32>
    %20 = arith.mulf %19, %19 : vector<8x32xf32>
    %cst_11 = arith.constant dense<0.000000e+00> : vector<8xf32>
    %21 = vector.multi_reduction <add>, %20, %cst_11 [1] : vector<8x32xf32> to vector<8xf32>
    %22 = vector.shape_cast %21 : vector<8xf32> to vector<8x1xf32>
    %cst_12 = arith.constant 3.200000e+01 : f32
    %23 = vector.broadcast %cst_12 : f32 to vector<8x1xf32>
    %24 = arith.divf %22, %23 : vector<8x1xf32>
    %25 = vector.broadcast %17 : vector<8x1xf32> to vector<8x32xf32>
    %26 = arith.subf %3, %25 : vector<8x32xf32>
    %cst_13 = arith.constant 9.99999996E-13 : f32
    %27 = vector.broadcast %cst_13 : f32 to vector<8x1xf32>
    %28 = arith.addf %24, %27 : vector<8x1xf32>
    %29 = math.rsqrt %28 : vector<8x1xf32>
    %30 = vector.broadcast %29 : vector<8x1xf32> to vector<8x32xf32>
    %31 = arith.mulf %26, %30 : vector<8x32xf32>
    %32 = vector.broadcast %11 : vector<1x32xf32> to vector<8x32xf32>
    %33 = arith.mulf %31, %32 : vector<8x32xf32>
    %34 = vector.broadcast %13 : vector<1x32xf32> to vector<8x32xf32>
    %35 = arith.addf %33, %34 : vector<8x32xf32>
    %36 = arith.truncf %35 : vector<8x32xf32> to vector<8x32xbf16>
    %c0_14 = arith.constant 0 : index
    %c0_15 = arith.constant 0 : index
    %c0_16 = arith.constant 0 : index
    %37 = vector.load %arg9[%c0_14, %c0_15, %c0_16] : memref<1x32x96xbf16, #tpu.memory_space<vmem>>, vector<1x32x96xbf16>
    %38 = vector.shape_cast %37 : vector<1x32x96xbf16> to vector<32x96xbf16>
    %cst_17 = arith.constant dense<0.000000e+00> : vector<8x96xf32>
    %39 = tpu.matmul %36, %38, %cst_17 {dimension_numbers = #tpu.dot_dimension_numbers<[1], [0], [0], [1], [0, 0, 1, 1], [], []>} : vector<8x32xbf16>, vector<32x96xbf16>, vector<8x96xf32> -> vector<8x96xf32>
    %c0_18 = arith.constant 0 : index
    %c0_19 = arith.constant 0 : index
    %c0_20 = arith.constant 0 : index
    %40 = vector.load %arg10[%c0_18, %c0_19, %c0_20] : memref<1x1x96xf32, #tpu.memory_space<vmem>>, vector<1x1x96xf32>
    %41 = vector.shape_cast %40 : vector<1x1x96xf32> to vector<1x96xf32>
    %42 = vector.broadcast %41 : vector<1x96xf32> to vector<8x96xf32>
    %43 = arith.addf %39, %42 : vector<8x96xf32>
    %44 = vector.extract_strided_slice %43 {offsets = [0, 0], sizes = [8, 32], strides = [1, 1]} : vector<8x96xf32> to vector<8x32xf32>
    %cst_21 = arith.constant 0.353553385 : f32
    %45 = vector.broadcast %cst_21 : f32 to vector<8x32xf32>
    %46 = arith.mulf %44, %45 : vector<8x32xf32>
    %47 = vector.extract_strided_slice %43 {offsets = [0, 32], sizes = [8, 32], strides = [1, 1]} : vector<8x96xf32> to vector<8x32xf32>
    %48 = vector.extract_strided_slice %43 {offsets = [0, 64], sizes = [8, 32], strides = [1, 1]} : vector<8x96xf32> to vector<8x32xf32>
    %49 = vector.extract_strided_slice %46 {offsets = [0, 0], sizes = [8, 8], strides = [1, 1]} : vector<8x32xf32> to vector<8x8xf32>
    %50 = arith.truncf %49 : vector<8x8xf32> to vector<8x8xbf16>
    %51 = vector.extract_strided_slice %47 {offsets = [0, 0], sizes = [8, 8], strides = [1, 1]} : vector<8x32xf32> to vector<8x8xf32>
    %52 = arith.truncf %51 : vector<8x8xf32> to vector<8x8xbf16>
    %cst_22 = arith.constant dense<0.000000e+00> : vector<8x8xf32>
    %53 = tpu.matmul %50, %52, %cst_22 {dimension_numbers = #tpu.dot_dimension_numbers<[1], [1], [0], [0], [0, 0, 1, 0], [], []>} : vector<8x8xbf16>, vector<8x8xbf16>, vector<8x8xf32> -> vector<8x8xf32>
    %54 = vector.broadcast %9 : vector<1x8xf32> to vector<8x8xf32>
    %55 = arith.addf %53, %54 : vector<8x8xf32>
    %cst_23 = arith.constant dense<0xFF800000> : vector<8xf32>
    %56 = vector.multi_reduction <maximumf>, %55, %cst_23 [1] : vector<8x8xf32> to vector<8xf32>
    %57 = vector.shape_cast %56 : vector<8xf32> to vector<8x1xf32>
    %58 = vector.broadcast %57 : vector<8x1xf32> to vector<8x8xf32>
    %59 = arith.subf %55, %58 : vector<8x8xf32>
    %60 = math.exp %59 : vector<8x8xf32>
    %cst_24 = arith.constant dense<0.000000e+00> : vector<8xf32>
    %61 = vector.multi_reduction <add>, %60, %cst_24 [1] : vector<8x8xf32> to vector<8xf32>
    %62 = vector.shape_cast %61 : vector<8xf32> to vector<8x1xf32>
    %63 = tpu.reciprocal %62 : vector<8x1xf32> -> vector<8x1xf32>
    %64 = vector.broadcast %63 : vector<8x1xf32> to vector<8x8xf32>
    %65 = arith.mulf %60, %64 : vector<8x8xf32>
    %66 = arith.truncf %65 : vector<8x8xf32> to vector<8x8xbf16>
    %67 = vector.extract_strided_slice %48 {offsets = [0, 0], sizes = [8, 8], strides = [1, 1]} : vector<8x32xf32> to vector<8x8xf32>
    %68 = arith.truncf %67 : vector<8x8xf32> to vector<8x8xbf16>
    %cst_25 = arith.constant dense<0.000000e+00> : vector<8x8xf32>
    %69 = tpu.matmul %66, %68, %cst_25 {dimension_numbers = #tpu.dot_dimension_numbers<[1], [0], [0], [1], [0, 0, 1, 1], [], []>} : vector<8x8xbf16>, vector<8x8xbf16>, vector<8x8xf32> -> vector<8x8xf32>
    %c0_26 = arith.constant 0 : index
    %c0_27 = arith.constant 0 : index
    %70 = vector.load %arg23[%c0_26, %c0_27] : memref<8x32xf32, #tpu.memory_space<vmem>>, vector<8x8xf32>
    tpu.vector_store %arg23[%c0_26, %c0_27], %69 {strides = array<i32>} : memref<8x32xf32, #tpu.memory_space<vmem>>, vector<8x8xf32>,
    %71 = vector.extract_strided_slice %46 {offsets = [0, 8], sizes = [8, 8], strides = [1, 1]} : vector<8x32xf32> to vector<8x8xf32>
    %72 = arith.truncf %71 : vector<8x8xf32> to vector<8x8xbf16>
    %73 = vector.extract_strided_slice %47 {offsets = [0, 8], sizes = [8, 8], strides = [1, 1]} : vector<8x32xf32> to vector<8x8xf32>
    %74 = arith.truncf %73 : vector<8x8xf32> to vector<8x8xbf16>
    %cst_28 = arith.constant dense<0.000000e+00> : vector<8x8xf32>
    %75 = tpu.matmul %72, %74, %cst_28 {dimension_numbers = #tpu.dot_dimension_numbers<[1], [1], [0], [0], [0, 0, 1, 0], [], []>} : vector<8x8xbf16>, vector<8x8xbf16>, vector<8x8xf32> -> vector<8x8xf32>
    %76 = vector.broadcast %9 : vector<1x8xf32> to vector<8x8xf32>
    %77 = arith.addf %75, %76 : vector<8x8xf32>
    %cst_29 = arith.constant dense<0xFF800000> : vector<8xf32>
    %78 = vector.multi_reduction <maximumf>, %77, %cst_29 [1] : vector<8x8xf32> to vector<8xf32>
    %79 = vector.shape_cast %78 : vector<8xf32> to vector<8x1xf32>
    %80 = vector.broadcast %79 : vector<8x1xf32> to vector<8x8xf32>
    %81 = arith.subf %77, %80 : vector<8x8xf32>
    %82 = math.exp %81 : vector<8x8xf32>
    %cst_30 = arith.constant dense<0.000000e+00> : vector<8xf32>
    %83 = vector.multi_reduction <add>, %82, %cst_30 [1] : vector<8x8xf32> to vector<8xf32>
    %84 = vector.shape_cast %83 : vector<8xf32> to vector<8x1xf32>
    %85 = tpu.reciprocal %84 : vector<8x1xf32> -> vector<8x1xf32>
    %86 = vector.broadcast %85 : vector<8x1xf32> to vector<8x8xf32>
    %87 = arith.mulf %82, %86 : vector<8x8xf32>
    %88 = arith.truncf %87 : vector<8x8xf32> to vector<8x8xbf16>
    %89 = vector.extract_strided_slice %48 {offsets = [0, 8], sizes = [8, 8], strides = [1, 1]} : vector<8x32xf32> to vector<8x8xf32>
    %90 = arith.truncf %89 : vector<8x8xf32> to vector<8x8xbf16>
    %cst_31 = arith.constant dense<0.000000e+00> : vector<8x8xf32>
    %91 = tpu.matmul %88, %90, %cst_31 {dimension_numbers = #tpu.dot_dimension_numbers<[1], [0], [0], [1], [0, 0, 1, 1], [], []>} : vector<8x8xbf16>, vector<8x8xbf16>, vector<8x8xf32> -> vector<8x8xf32>
    %c0_32 = arith.constant 0 : index
    %c8 = arith.constant 8 : index
    %92 = vector.load %arg23[%c0_32, %c8] : memref<8x32xf32, #tpu.memory_space<vmem>>, vector<8x8xf32>
    tpu.vector_store %arg23[%c0_32, %c8], %91 {strides = array<i32>} : memref<8x32xf32, #tpu.memory_space<vmem>>, vector<8x8xf32>,
    %93 = vector.extract_strided_slice %46 {offsets = [0, 16], sizes = [8, 8], strides = [1, 1]} : vector<8x32xf32> to vector<8x8xf32>
    %94 = arith.truncf %93 : vector<8x8xf32> to vector<8x8xbf16>
    %95 = vector.extract_strided_slice %47 {offsets = [0, 16], sizes = [8, 8], strides = [1, 1]} : vector<8x32xf32> to vector<8x8xf32>
    %96 = arith.truncf %95 : vector<8x8xf32> to vector<8x8xbf16>
    %cst_33 = arith.constant dense<0.000000e+00> : vector<8x8xf32>
    %97 = tpu.matmul %94, %96, %cst_33 {dimension_numbers = #tpu.dot_dimension_numbers<[1], [1], [0], [0], [0, 0, 1, 0], [], []>} : vector<8x8xbf16>, vector<8x8xbf16>, vector<8x8xf32> -> vector<8x8xf32>
    %98 = vector.broadcast %9 : vector<1x8xf32> to vector<8x8xf32>
    %99 = arith.addf %97, %98 : vector<8x8xf32>
    %cst_34 = arith.constant dense<0xFF800000> : vector<8xf32>
    %100 = vector.multi_reduction <maximumf>, %99, %cst_34 [1] : vector<8x8xf32> to vector<8xf32>
    %101 = vector.shape_cast %100 : vector<8xf32> to vector<8x1xf32>
    %102 = vector.broadcast %101 : vector<8x1xf32> to vector<8x8xf32>
    %103 = arith.subf %99, %102 : vector<8x8xf32>
    %104 = math.exp %103 : vector<8x8xf32>
    %cst_35 = arith.constant dense<0.000000e+00> : vector<8xf32>
    %105 = vector.multi_reduction <add>, %104, %cst_35 [1] : vector<8x8xf32> to vector<8xf32>
    %106 = vector.shape_cast %105 : vector<8xf32> to vector<8x1xf32>
    %107 = tpu.reciprocal %106 : vector<8x1xf32> -> vector<8x1xf32>
    %108 = vector.broadcast %107 : vector<8x1xf32> to vector<8x8xf32>
    %109 = arith.mulf %104, %108 : vector<8x8xf32>
    %110 = arith.truncf %109 : vector<8x8xf32> to vector<8x8xbf16>
    %111 = vector.extract_strided_slice %48 {offsets = [0, 16], sizes = [8, 8], strides = [1, 1]} : vector<8x32xf32> to vector<8x8xf32>
    %112 = arith.truncf %111 : vector<8x8xf32> to vector<8x8xbf16>
    %cst_36 = arith.constant dense<0.000000e+00> : vector<8x8xf32>
    %113 = tpu.matmul %110, %112, %cst_36 {dimension_numbers = #tpu.dot_dimension_numbers<[1], [0], [0], [1], [0, 0, 1, 1], [], []>} : vector<8x8xbf16>, vector<8x8xbf16>, vector<8x8xf32> -> vector<8x8xf32>
    %c0_37 = arith.constant 0 : index
    %c16 = arith.constant 16 : index
    %114 = vector.load %arg23[%c0_37, %c16] : memref<8x32xf32, #tpu.memory_space<vmem>>, vector<8x8xf32>
    tpu.vector_store %arg23[%c0_37, %c16], %113 {strides = array<i32>} : memref<8x32xf32, #tpu.memory_space<vmem>>, vector<8x8xf32>,
    %115 = vector.extract_strided_slice %46 {offsets = [0, 24], sizes = [8, 8], strides = [1, 1]} : vector<8x32xf32> to vector<8x8xf32>
    %116 = arith.truncf %115 : vector<8x8xf32> to vector<8x8xbf16>
    %117 = vector.extract_strided_slice %47 {offsets = [0, 24], sizes = [8, 8], strides = [1, 1]} : vector<8x32xf32> to vector<8x8xf32>
    %118 = arith.truncf %117 : vector<8x8xf32> to vector<8x8xbf16>
    %cst_38 = arith.constant dense<0.000000e+00> : vector<8x8xf32>
    %119 = tpu.matmul %116, %118, %cst_38 {dimension_numbers = #tpu.dot_dimension_numbers<[1], [1], [0], [0], [0, 0, 1, 0], [], []>} : vector<8x8xbf16>, vector<8x8xbf16>, vector<8x8xf32> -> vector<8x8xf32>
    %120 = vector.broadcast %9 : vector<1x8xf32> to vector<8x8xf32>
    %121 = arith.addf %119, %120 : vector<8x8xf32>
    %cst_39 = arith.constant dense<0xFF800000> : vector<8xf32>
    %122 = vector.multi_reduction <maximumf>, %121, %cst_39 [1] : vector<8x8xf32> to vector<8xf32>
    %123 = vector.shape_cast %122 : vector<8xf32> to vector<8x1xf32>
    %124 = vector.broadcast %123 : vector<8x1xf32> to vector<8x8xf32>
    %125 = arith.subf %121, %124 : vector<8x8xf32>
    %126 = math.exp %125 : vector<8x8xf32>
    %cst_40 = arith.constant dense<0.000000e+00> : vector<8xf32>
    %127 = vector.multi_reduction <add>, %126, %cst_40 [1] : vector<8x8xf32> to vector<8xf32>
    %128 = vector.shape_cast %127 : vector<8xf32> to vector<8x1xf32>
    %129 = tpu.reciprocal %128 : vector<8x1xf32> -> vector<8x1xf32>
    %130 = vector.broadcast %129 : vector<8x1xf32> to vector<8x8xf32>
    %131 = arith.mulf %126, %130 : vector<8x8xf32>
    %132 = arith.truncf %131 : vector<8x8xf32> to vector<8x8xbf16>
    %133 = vector.extract_strided_slice %48 {offsets = [0, 24], sizes = [8, 8], strides = [1, 1]} : vector<8x32xf32> to vector<8x8xf32>
    %134 = arith.truncf %133 : vector<8x8xf32> to vector<8x8xbf16>
    %cst_41 = arith.constant dense<0.000000e+00> : vector<8x8xf32>
    %135 = tpu.matmul %132, %134, %cst_41 {dimension_numbers = #tpu.dot_dimension_numbers<[1], [0], [0], [1], [0, 0, 1, 1], [], []>} : vector<8x8xbf16>, vector<8x8xbf16>, vector<8x8xf32> -> vector<8x8xf32>
    %c0_42 = arith.constant 0 : index
    %c24 = arith.constant 24 : index
    %136 = vector.load %arg23[%c0_42, %c24] : memref<8x32xf32, #tpu.memory_space<vmem>>, vector<8x8xf32>
    tpu.vector_store %arg23[%c0_42, %c24], %135 {strides = array<i32>} : memref<8x32xf32, #tpu.memory_space<vmem>>, vector<8x8xf32>,
    %c0_43 = arith.constant 0 : index
    %c0_44 = arith.constant 0 : index
    %137 = vector.load %arg23[%c0_43, %c0_44] : memref<8x32xf32, #tpu.memory_space<vmem>>, vector<8x32xf32>
    %138 = arith.truncf %137 : vector<8x32xf32> to vector<8x32xbf16>
    %c0_45 = arith.constant 0 : index
    %c0_46 = arith.constant 0 : index
    %c0_47 = arith.constant 0 : index
    %139 = vector.load %arg11[%c0_45, %c0_46, %c0_47] : memref<1x32x32xbf16, #tpu.memory_space<vmem>>, vector<1x32x32xbf16>
    %140 = vector.shape_cast %139 : vector<1x32x32xbf16> to vector<32x32xbf16>
    %cst_48 = arith.constant dense<0.000000e+00> : vector<8x32xf32>
    %141 = tpu.matmul %138, %140, %cst_48 {dimension_numbers = #tpu.dot_dimension_numbers<[1], [0], [0], [1], [0, 0, 1, 1], [], []>} : vector<8x32xbf16>, vector<32x32xbf16>, vector<8x32xf32> -> vector<8x32xf32>
    %142 = arith.addf %3, %141 : vector<8x32xf32>
    %c0_49 = arith.constant 0 : index
    %c0_50 = arith.constant 0 : index
    %c0_51 = arith.constant 0 : index
    %143 = vector.load %arg12[%c0_49, %c0_50, %c0_51] : memref<1x1x32xf32, #tpu.memory_space<vmem>>, vector<1x1x32xf32>
    %144 = vector.shape_cast %143 : vector<1x1x32xf32> to vector<1x32xf32>
    %145 = vector.broadcast %144 : vector<1x32xf32> to vector<8x32xf32>
    %146 = arith.addf %142, %145 : vector<8x32xf32>
    %c0_52 = arith.constant 0 : index
    %c0_53 = arith.constant 0 : index
    %c0_54 = arith.constant 0 : index
    %147 = vector.load %arg13[%c0_52, %c0_53, %c0_54] : memref<1x1x32xf32, #tpu.memory_space<vmem>>, vector<1x1x32xf32>
    %148 = vector.shape_cast %147 : vector<1x1x32xf32> to vector<1x32xf32>
    %c0_55 = arith.constant 0 : index
    %c0_56 = arith.constant 0 : index
    %c0_57 = arith.constant 0 : index
    %149 = vector.load %arg14[%c0_55, %c0_56, %c0_57] : memref<1x1x32xf32, #tpu.memory_space<vmem>>, vector<1x1x32xf32>
    %150 = vector.shape_cast %149 : vector<1x1x32xf32> to vector<1x32xf32>
    %cst_58 = arith.constant dense<0.000000e+00> : vector<8xf32>
    %151 = vector.multi_reduction <add>, %146, %cst_58 [1] : vector<8x32xf32> to vector<8xf32>
    %152 = vector.shape_cast %151 : vector<8xf32> to vector<8x1xf32>
    %cst_59 = arith.constant 3.200000e+01 : f32
    %153 = vector.broadcast %cst_59 : f32 to vector<8x1xf32>
    %154 = arith.divf %152, %153 : vector<8x1xf32>
    %155 = vector.broadcast %154 : vector<8x1xf32> to vector<8x32xf32>
    %156 = arith.subf %146, %155 : vector<8x32xf32>
    %157 = arith.mulf %156, %156 : vector<8x32xf32>
    %cst_60 = arith.constant dense<0.000000e+00> : vector<8xf32>
    %158 = vector.multi_reduction <add>, %157, %cst_60 [1] : vector<8x32xf32> to vector<8xf32>
    %159 = vector.shape_cast %158 : vector<8xf32> to vector<8x1xf32>
    %cst_61 = arith.constant 3.200000e+01 : f32
    %160 = vector.broadcast %cst_61 : f32 to vector<8x1xf32>
    %161 = arith.divf %159, %160 : vector<8x1xf32>
    %162 = vector.broadcast %154 : vector<8x1xf32> to vector<8x32xf32>
    %163 = arith.subf %146, %162 : vector<8x32xf32>
    %cst_62 = arith.constant 9.99999996E-13 : f32
    %164 = vector.broadcast %cst_62 : f32 to vector<8x1xf32>
    %165 = arith.addf %161, %164 : vector<8x1xf32>
    %166 = math.rsqrt %165 : vector<8x1xf32>
    %167 = vector.broadcast %166 : vector<8x1xf32> to vector<8x32xf32>
    %168 = arith.mulf %163, %167 : vector<8x32xf32>
    %169 = vector.broadcast %148 : vector<1x32xf32> to vector<8x32xf32>
    %170 = arith.mulf %168, %169 : vector<8x32xf32>
    %171 = vector.broadcast %150 : vector<1x32xf32> to vector<8x32xf32>
    %172 = arith.addf %170, %171 : vector<8x32xf32>
    %173 = arith.truncf %172 : vector<8x32xf32> to vector<8x32xbf16>
    %c0_63 = arith.constant 0 : index
    %c0_64 = arith.constant 0 : index
    %c0_65 = arith.constant 0 : index
    %174 = vector.load %arg15[%c0_63, %c0_64, %c0_65] : memref<1x32x64xbf16, #tpu.memory_space<vmem>>, vector<1x32x64xbf16>
    %175 = vector.shape_cast %174 : vector<1x32x64xbf16> to vector<32x64xbf16>
    %cst_66 = arith.constant dense<0.000000e+00> : vector<8x64xf32>
    %176 = tpu.matmul %173, %175, %cst_66 {dimension_numbers = #tpu.dot_dimension_numbers<[1], [0], [0], [1], [0, 0, 1, 1], [], []>} : vector<8x32xbf16>, vector<32x64xbf16>, vector<8x64xf32> -> vector<8x64xf32>
    %c0_67 = arith.constant 0 : index
    %c0_68 = arith.constant 0 : index
    %c0_69 = arith.constant 0 : index
    %177 = vector.load %arg16[%c0_67, %c0_68, %c0_69] : memref<1x1x64xf32, #tpu.memory_space<vmem>>, vector<1x1x64xf32>
    %178 = vector.shape_cast %177 : vector<1x1x64xf32> to vector<1x64xf32>
    %179 = vector.broadcast %178 : vector<1x64xf32> to vector<8x64xf32>
    %180 = arith.addf %176, %179 : vector<8x64xf32>
    %181 = arith.mulf %180, %180 : vector<8x64xf32>
    %182 = arith.mulf %180, %181 : vector<8x64xf32>
    %cst_70 = arith.constant 4.471500e-02 : f32
    %183 = vector.broadcast %cst_70 : f32 to vector<8x64xf32>
    %184 = arith.mulf %183, %182 : vector<8x64xf32>
    %185 = arith.addf %180, %184 : vector<8x64xf32>
    %cst_71 = arith.constant 0.797884583 : f32
    %186 = vector.broadcast %cst_71 : f32 to vector<8x64xf32>
    %187 = arith.mulf %186, %185 : vector<8x64xf32>
    %188 = math.tanh %187 : vector<8x64xf32>
    %cst_72 = arith.constant 1.000000e+00 : f32
    %189 = vector.broadcast %cst_72 : f32 to vector<8x64xf32>
    %190 = arith.addf %189, %188 : vector<8x64xf32>
    %cst_73 = arith.constant 5.000000e-01 : f32
    %191 = vector.broadcast %cst_73 : f32 to vector<8x64xf32>
    %192 = arith.mulf %191, %190 : vector<8x64xf32>
    %193 = arith.mulf %180, %192 : vector<8x64xf32>
    %194 = arith.truncf %193 : vector<8x64xf32> to vector<8x64xbf16>
    %c0_74 = arith.constant 0 : index
    %c0_75 = arith.constant 0 : index
    %c0_76 = arith.constant 0 : index
    %195 = vector.load %arg17[%c0_74, %c0_75, %c0_76] : memref<1x64x32xbf16, #tpu.memory_space<vmem>>, vector<1x64x32xbf16>
    %196 = vector.shape_cast %195 : vector<1x64x32xbf16> to vector<64x32xbf16>
    %cst_77 = arith.constant dense<0.000000e+00> : vector<8x32xf32>
    %197 = tpu.matmul %194, %196, %cst_77 {dimension_numbers = #tpu.dot_dimension_numbers<[1], [0], [0], [1], [0, 0, 1, 1], [], []>} : vector<8x64xbf16>, vector<64x32xbf16>, vector<8x32xf32> -> vector<8x32xf32>
    %198 = arith.addf %146, %197 : vector<8x32xf32>
    %c0_78 = arith.constant 0 : index
    %c0_79 = arith.constant 0 : index
    %c0_80 = arith.constant 0 : index
    %199 = vector.load %arg18[%c0_78, %c0_79, %c0_80] : memref<1x1x32xf32, #tpu.memory_space<vmem>>, vector<1x1x32xf32>
    %200 = vector.shape_cast %199 : vector<1x1x32xf32> to vector<1x32xf32>
    %201 = vector.broadcast %200 : vector<1x32xf32> to vector<8x32xf32>
    %202 = arith.addf %198, %201 : vector<8x32xf32>
    %c0_81 = arith.constant 0 : index
    %c0_82 = arith.constant 0 : index
    %203 = vector.load %arg22[%c0_81, %c0_82] : memref<8x32xf32, #tpu.memory_space<vmem>>, vector<8x32xf32>
    tpu.vector_store %arg22[%c0_81, %c0_82], %202 {strides = array<i32>} : memref<8x32xf32, #tpu.memory_space<vmem>>, vector<8x32xf32>,
    %c1_i32 = arith.constant 1 : i32
    %204 = arith.cmpi eq, %arg1, %c1_i32 : i32
    %205 = arith.extui %204 : i1 to i32
    %c0_i32_83 = arith.constant 0 : i32
    %206 = arith.cmpi ne, %205, %c0_i32_83 : i32
    scf.if %206 {
      %207 = vector.extract_strided_slice %202 {offsets = [0, 0], sizes = [1, 32], strides = [1, 1]} : vector<8x32xf32> to vector<1x32xf32>
      %c0_84 = arith.constant 0 : index
      %c0_85 = arith.constant 0 : index
      %208 = vector.load %arg19[%c0_84, %c0_85] : memref<1x32xf32, #tpu.memory_space<vmem>>, vector<1x32xf32>
      %c0_86 = arith.constant 0 : index
      %c0_87 = arith.constant 0 : index
      %209 = vector.load %arg20[%c0_86, %c0_87] : memref<1x32xf32, #tpu.memory_space<vmem>>, vector<1x32xf32>
      %cst_88 = arith.constant dense<0.000000e+00> : vector<1xf32>
      %210 = vector.multi_reduction <add>, %207, %cst_88 [1] : vector<1x32xf32> to vector<1xf32>
      %211 = vector.shape_cast %210 : vector<1xf32> to vector<1x1xf32>
      %cst_89 = arith.constant 3.200000e+01 : f32
      %212 = vector.broadcast %cst_89 : f32 to vector<1x1xf32>
      %213 = arith.divf %211, %212 : vector<1x1xf32>
      %214 = vector.broadcast %213 : vector<1x1xf32> to vector<1x32xf32>
      %215 = arith.subf %207, %214 : vector<1x32xf32>
      %216 = arith.mulf %215, %215 : vector<1x32xf32>
      %cst_90 = arith.constant dense<0.000000e+00> : vector<1xf32>
      %217 = vector.multi_reduction <add>, %216, %cst_90 [1] : vector<1x32xf32> to vector<1xf32>
      %218 = vector.shape_cast %217 : vector<1xf32> to vector<1x1xf32>
      %cst_91 = arith.constant 3.200000e+01 : f32
      %219 = vector.broadcast %cst_91 : f32 to vector<1x1xf32>
      %220 = arith.divf %218, %219 : vector<1x1xf32>
      %221 = vector.broadcast %213 : vector<1x1xf32> to vector<1x32xf32>
      %222 = arith.subf %207, %221 : vector<1x32xf32>
      %cst_92 = arith.constant 9.99999996E-13 : f32
      %223 = vector.broadcast %cst_92 : f32 to vector<1x1xf32>
      %224 = arith.addf %220, %223 : vector<1x1xf32>
      %225 = math.rsqrt %224 : vector<1x1xf32>
      %226 = vector.broadcast %225 : vector<1x1xf32> to vector<1x32xf32>
      %227 = arith.mulf %222, %226 : vector<1x32xf32>
      %228 = arith.mulf %227, %208 : vector<1x32xf32>
      %229 = arith.addf %228, %209 : vector<1x32xf32>
      %c0_93 = arith.constant 0 : index
      %c0_94 = arith.constant 0 : index
      %c0_95 = arith.constant 0 : index
      %230 = vector.load %arg21[%c0_93, %c0_94, %c0_95] : memref<1x1x32xf32, #tpu.memory_space<vmem>>, vector<1x1x32xf32>
      %231 = vector.shape_cast %230 : vector<1x1x32xf32> to vector<1x32xf32>
      %232 = vector.shape_cast %229 : vector<1x32xf32> to vector<1x1x32xf32>
      tpu.vector_store %arg21[%c0_93, %c0_94, %c0_95], %232 {strides = array<i32>} : memref<1x1x32xf32, #tpu.memory_space<vmem>>, vector<1x1x32xf32>,
    } else {
    }
    return
  }
  func.func @transform_0(%arg0: i32, %arg1: i32) -> (i32, i32, i32) {
    %c0_i32 = arith.constant 0 : i32
    %c0_i32_0 = arith.constant 0 : i32
    %c0_i32_1 = arith.constant 0 : i32
    return %arg0, %c0_i32, %c0_i32_0 : i32, i32, i32
  }
  func.func @transform_1(%arg0: i32, %arg1: i32) -> (i32, i32) {
    %c0_i32 = arith.constant 0 : i32
    %c0_i32_0 = arith.constant 0 : i32
    %c0_i32_1 = arith.constant 0 : i32
    return %c0_i32, %c0_i32_0 : i32, i32
  }
  func.func @transform_2(%arg0: i32, %arg1: i32) -> (i32, i32) {
    %c0_i32 = arith.constant 0 : i32
    %c0_i32_0 = arith.constant 0 : i32
    %c0_i32_1 = arith.constant 0 : i32
    return %c0_i32, %c0_i32_0 : i32, i32
  }
  func.func @transform_3(%arg0: i32, %arg1: i32) -> (i32, i32) {
    %c0_i32 = arith.constant 0 : i32
    %c0_i32_0 = arith.constant 0 : i32
    %c0_i32_1 = arith.constant 0 : i32
    return %c0_i32, %c0_i32_0 : i32, i32
  }
  func.func @transform_4(%arg0: i32, %arg1: i32) -> (i32, i32) {
    %c0_i32 = arith.constant 0 : i32
    %c0_i32_0 = arith.constant 0 : i32
    %c0_i32_1 = arith.constant 0 : i32
    return %c0_i32, %c0_i32_0 : i32, i32
  }
  func.func @transform_5(%arg0: i32, %arg1: i32) -> (i32, i32, i32) {
    %c0_i32 = arith.constant 0 : i32
    %c0_i32_0 = arith.constant 0 : i32
    %c0_i32_1 = arith.constant 0 : i32
    return %arg1, %c0_i32, %c0_i32_0 : i32, i32, i32
  }
  func.func @transform_6(%arg0: i32, %arg1: i32) -> (i32, i32, i32) {
    %c0_i32 = arith.constant 0 : i32
    %c0_i32_0 = arith.constant 0 : i32
    %c0_i32_1 = arith.constant 0 : i32
    return %arg1, %c0_i32, %c0_i32_0 : i32, i32, i32
  }
  func.func @transform_7(%arg0: i32, %arg1: i32) -> (i32, i32, i32) {
    %c0_i32 = arith.constant 0 : i32
    %c0_i32_0 = arith.constant 0 : i32
    %c0_i32_1 = arith.constant 0 : i32
    return %arg1, %c0_i32, %c0_i32_0 : i32, i32, i32
  }
  func.func @transform_8(%arg0: i32, %arg1: i32) -> (i32, i32, i32) {
    %c0_i32 = arith.constant 0 : i32
    %c0_i32_0 = arith.constant 0 : i32
    %c0_i32_1 = arith.constant 0 : i32
    return %arg1, %c0_i32, %c0_i32_0 : i32, i32, i32
  }
  func.func @transform_9(%arg0: i32, %arg1: i32) -> (i32, i32, i32) {
    %c0_i32 = arith.constant 0 : i32
    %c0_i32_0 = arith.constant 0 : i32
    %c0_i32_1 = arith.constant 0 : i32
    return %arg1, %c0_i32, %c0_i32_0 : i32, i32, i32
  }
  func.func @transform_10(%arg0: i32, %arg1: i32) -> (i32, i32, i32) {
    %c0_i32 = arith.constant 0 : i32
    %c0_i32_0 = arith.constant 0 : i32
    %c0_i32_1 = arith.constant 0 : i32
    return %arg1, %c0_i32, %c0_i32_0 : i32, i32, i32
  }
  func.func @transform_11(%arg0: i32, %arg1: i32) -> (i32, i32, i32) {
    %c0_i32 = arith.constant 0 : i32
    %c0_i32_0 = arith.constant 0 : i32
    %c0_i32_1 = arith.constant 0 : i32
    return %arg1, %c0_i32, %c0_i32_0 : i32, i32, i32
  }
  func.func @transform_12(%arg0: i32, %arg1: i32) -> (i32, i32, i32) {
    %c0_i32 = arith.constant 0 : i32
    %c0_i32_0 = arith.constant 0 : i32
    %c0_i32_1 = arith.constant 0 : i32
    return %arg1, %c0_i32, %c0_i32_0 : i32, i32, i32
  }
  func.func @transform_13(%arg0: i32, %arg1: i32) -> (i32, i32, i32) {
    %c0_i32 = arith.constant 0 : i32
    %c0_i32_0 = arith.constant 0 : i32
    %c0_i32_1 = arith.constant 0 : i32
    return %arg1, %c0_i32, %c0_i32_0 : i32, i32, i32
  }
  func.func @transform_14(%arg0: i32, %arg1: i32) -> (i32, i32, i32) {
    %c0_i32 = arith.constant 0 : i32
    %c0_i32_0 = arith.constant 0 : i32
    %c0_i32_1 = arith.constant 0 : i32
    return %arg1, %c0_i32, %c0_i32_0 : i32, i32, i32
  }
  func.func @transform_15(%arg0: i32, %arg1: i32) -> (i32, i32, i32) {
    %c0_i32 = arith.constant 0 : i32
    %c0_i32_0 = arith.constant 0 : i32
    %c0_i32_1 = arith.constant 0 : i32
    return %arg1, %c0_i32, %c0_i32_0 : i32, i32, i32
  }
  func.func @transform_16(%arg0: i32, %arg1: i32) -> (i32, i32, i32) {
    %c0_i32 = arith.constant 0 : i32
    %c0_i32_0 = arith.constant 0 : i32
    %c0_i32_1 = arith.constant 0 : i32
    return %arg1, %c0_i32, %c0_i32_0 : i32, i32, i32
  }
  func.func @transform_17(%arg0: i32, %arg1: i32) -> (i32, i32) {
    %c0_i32 = arith.constant 0 : i32
    %c0_i32_0 = arith.constant 0 : i32
    %c0_i32_1 = arith.constant 0 : i32
    return %c0_i32, %c0_i32_0 : i32, i32
  }
  func.func @transform_18(%arg0: i32, %arg1: i32) -> (i32, i32) {
    %c0_i32 = arith.constant 0 : i32
    %c0_i32_0 = arith.constant 0 : i32
    %c0_i32_1 = arith.constant 0 : i32
    return %c0_i32, %c0_i32_0 : i32, i32
  }
  func.func @transform_19(%arg0: i32, %arg1: i32) -> (i32, i32, i32) {
    %c0_i32 = arith.constant 0 : i32
    %c0_i32_0 = arith.constant 0 : i32
    %c0_i32_1 = arith.constant 0 : i32
    return %arg0, %c0_i32, %c0_i32_0 : i32, i32, i32
  }
}

</mosaic_0001>

<llo_original>
// kernel: tpu_custom_call.1
$region0: #{tpu_custom_call.1}
  #allocation0 [shape = 'u32[]', space=smem, size = 0x4, offset = 0x4, fixed_abs, tag = 'smem constant byte address 0x4 - core index']
  #allocation1 [shape = 'u32[144,128]{1,0:T(1,128)}', space=vmem, size = 0x12000, scoped, tag = 'internal scratch']
  #allocation2 [shape = 'f32[8,32]{1,0:T(8,128)}', space=vmem, size = 0x1000, scoped, tag = 'scratch operand']
  #allocation3 [shape = 'f32[8,32]{1,0:T(8,128)}', space=vmem, size = 0x1000, scoped, tag = 'scratch operand']
  %s0 = inlined_call_operand.vmem [shape: bf16[2,4,192], index: 0, kind: input, shape index: {}]
  %s1 = inlined_call_operand.vmem [shape: bf16[192,32], index: 1, kind: input, shape index: {}]
  %s2 = inlined_call_operand.vmem [shape: f32[1,32], index: 2, kind: input, shape index: {}]
  %s3 = inlined_call_operand.vmem [shape: f32[1,32], index: 3, kind: input, shape index: {}]
  %s4 = inlined_call_operand.vmem [shape: f32[5,32], index: 4, kind: input, shape index: {}]
  %s5 = inlined_call_operand.vmem [shape: f32[2,1,32], index: 5, kind: input, shape index: {}]
  %s6 = inlined_call_operand.vmem [shape: f32[2,1,32], index: 6, kind: input, shape index: {}]
  %s7 = inlined_call_operand.vmem [shape: bf16[2,32,96], index: 7, kind: input, shape index: {}]
  %s8 = inlined_call_operand.vmem [shape: f32[2,1,96], index: 8, kind: input, shape index: {}]
  %s9 = inlined_call_operand.vmem [shape: bf16[2,32,32], index: 9, kind: input, shape index: {}]
  %s10 = inlined_call_operand.vmem [shape: f32[2,1,32], index: 10, kind: input, shape index: {}]
  %s11 = inlined_call_operand.vmem [shape: f32[2,1,32], index: 11, kind: input, shape index: {}]
  %s12 = inlined_call_operand.vmem [shape: f32[2,1,32], index: 12, kind: input, shape index: {}]
  %s13 = inlined_call_operand.vmem [shape: bf16[2,32,64], index: 13, kind: input, shape index: {}]
  %s14 = inlined_call_operand.vmem [shape: f32[2,1,64], index: 14, kind: input, shape index: {}]
  %s15 = inlined_call_operand.vmem [shape: bf16[2,64,32], index: 15, kind: input, shape index: {}]
  %s16 = inlined_call_operand.vmem [shape: f32[2,1,32], index: 16, kind: input, shape index: {}]
  %s17 = inlined_call_operand.vmem [shape: f32[1,32], index: 17, kind: input, shape index: {}]
  %s18 = inlined_call_operand.vmem [shape: f32[1,32], index: 18, kind: input, shape index: {}]
  %s19 = inlined_call_operand.hbm [shape: f32[2,1,32], index: 19, kind: output, shape index: {}]
  %s20 = sld [smem:[#allocation0]]
  $region117: #{tpu_custom_call.1} parent=0
    _
  %s22 = ssub.s32 1, %s20
  %s23 = scalar_select 0, %s22, %s20
  $region1: #{tpu_custom_call.1} parent=0
    #allocation4 [shape = 'u8[1024]{0}', space=vmem, size = 0x400, scoped, tag = 'output window, operand 0']
    #allocation5 [shape = 's32[2]{0}', space=sflag, size = 0x8, scoped, tag = 'scoped memory for tpu_custom_call.1']
    %24 = vsyncpa [#allocation5], 0
    %s25 = scalar_lea.sflag [#allocation5], 1
    %26 = vsyncpa %s25, 0
    loop: start=0, step=1, limit=6
    $region2: #{tpu_custom_call.1} parent=1 // loop_pre_header
      _
    $region3: #{tpu_custom_call.1} parent=1 // loop_header
      %s28 = sphi 0, %s32
      %p29 = scmp.ge.s32.totalorder %s28, 6
      %s35 = sphi 0, %s47
      %s36 = sphi 0, %s43
      %s37 = sphi 0, %s35
      %s38 = sphi 0, %s36
      %s39 = sphi 0, %s37
      %s40 = sphi 0, %s38
      %s50 = sphi 0, %s52
      %s53 = sphi 0, %s50
      %s54 = sphi 0, %s53
      %s70 = sphi 0, %s54
      %s74 = sphi 0, %s74
      %s76 = sphi 0, %s74
      %s77 = sphi 0, %s76
      %s91 = sphi 0, %s77
      %s95 = sphi 0, %s95
      %s97 = sphi 0, %s95
      %s98 = sphi 0, %s97
      %s112 = sphi 0, %s98
      %s116 = sphi 0, %s116
      %s118 = sphi 0, %s116
      %s119 = sphi 0, %s118
      %s133 = sphi 0, %s119
      %s137 = sphi 0, %s137
      %s139 = sphi 0, %s137
      %s140 = sphi 0, %s139
      %s154 = sphi 0, %s140
      %s160 = sphi 0, %s162
      %s163 = sphi 0, %s160
      %s164 = sphi 0, %s163
      %s180 = sphi 0, %s164
      %s186 = sphi 0, %s188
      %s189 = sphi 0, %s186
      %s190 = sphi 0, %s189
      %s206 = sphi 0, %s190
      %s212 = sphi 0, %s214
      %s215 = sphi 0, %s212
      %s216 = sphi 0, %s215
      %s232 = sphi 0, %s216
      %s238 = sphi 0, %s240
      %s241 = sphi 0, %s238
      %s242 = sphi 0, %s241
      %s258 = sphi 0, %s242
      %s264 = sphi 0, %s266
      %s267 = sphi 0, %s264
      %s268 = sphi 0, %s267
      %s284 = sphi 0, %s268
      %s290 = sphi 0, %s292
      %s293 = sphi 0, %s290
      %s294 = sphi 0, %s293
      %s310 = sphi 0, %s294
      %s316 = sphi 0, %s318
      %s319 = sphi 0, %s316
      %s320 = sphi 0, %s319
      %s336 = sphi 0, %s320
      %s342 = sphi 0, %s344
      %s345 = sphi 0, %s342
      %s346 = sphi 0, %s345
      %s362 = sphi 0, %s346
      %s368 = sphi 0, %s370
      %s371 = sphi 0, %s368
      %s372 = sphi 0, %s371
      %s388 = sphi 0, %s372
      %s394 = sphi 0, %s396
      %s397 = sphi 0, %s394
      %s398 = sphi 0, %s397
      %s414 = sphi 0, %s398
      %s420 = sphi 0, %s422
      %s423 = sphi 0, %s420
      %s424 = sphi 0, %s423
      %s440 = sphi 0, %s424
      %s446 = sphi 0, %s448
      %s449 = sphi 0, %s446
      %s450 = sphi 0, %s449
      %s466 = sphi 0, %s450
      %s470 = sphi 0, %s470
      %s472 = sphi 0, %s470
      %s473 = sphi 0, %s472
      %s487 = sphi 0, %s473
      %s491 = sphi 0, %s491
      %s493 = sphi 0, %s491
      %s494 = sphi 0, %s493
      %s508 = sphi 0, %s494
      %s514 = sphi 0, %s516
      %s517 = sphi 0, %s514
      %s518 = sphi 0, %s517
      %s534 = sphi 0, %s518
    $region4: #{tpu_custom_call.1} parent=1 // loop_header_branch
      %31 = sbr.rel (%p29) target = $region8
    $region5: #{tpu_custom_call.1} parent=1 // loop_body
      %s33 = ssub.s32 %s28, 1
      %s34 = ssub.s32 %s28, 2
      %s41 = sadd.s32 1, %s36
      %p42 = scmp.ge.s32.totalorder %s41, 2
      %s43 = scalar_select %p42, 0, %s41
      %s44 = sadd.s32 1, %s35
      %s45 = scalar_select %p42, %s44, %s35
      %p46 = scmp.ge.s32.totalorder %s45, 2
      %s47 = scalar_select %p46, 0, %s45
      %s48 = ssub.s32 %s35, %s47
      %p49 = scmp.eq.s32.totalorder %s48, 0
      %s51 = sadd.s32 %s50, 1
      %s52 = scalar_select %p49, %s50, %s51
      %p55 = pneg %p49
      %p56 = scmp.eq.s32.totalorder %s28, 3
      %p57 = por %p55, %p56
      %p58 = scmp.ne.s32.totalorder %s50, %s53
      %p59 = scmp.eq.s32.totalorder %s28, 0
      %p60 = por %p58, %p59
      %p61 = scmp.ne.s32.totalorder %s50, %s53
      %p62 = scmp.eq.s32.totalorder %s33, 3
      %p63 = por %p61, %p62
      %p64 = scmp.ne.s32.totalorder %s53, %s54
      %p65 = scmp.eq.s32.totalorder %s33, 0
      %p66 = por %p64, %p65
      %p67 = scmp.ne.s32.totalorder %s53, %s54
      %p68 = scmp.eq.s32.totalorder %s34, 3
      %p69 = por %p67, %p68
      %p71 = scmp.ne.s32.totalorder %s54, %s70
      %p72 = scmp.eq.s32.totalorder %s34, 0
      %p73 = por %p71, %p72
      %s75 = sadd.s32 %s74, 1
      %p78 = scmp.eq.s32.totalorder %s28, 3
      %p79 = scmp.ne.s32.totalorder %s74, %s76
      %p80 = scmp.eq.s32.totalorder %s28, 0
      %p81 = por %p79, %p80
      %p82 = scmp.ne.s32.totalorder %s74, %s76
      %p83 = scmp.eq.s32.totalorder %s33, 3
      %p84 = por %p82, %p83
      %p85 = scmp.ne.s32.totalorder %s76, %s77
      %p86 = scmp.eq.s32.totalorder %s33, 0
      %p87 = por %p85, %p86
      %p88 = scmp.ne.s32.totalorder %s76, %s77
      %p89 = scmp.eq.s32.totalorder %s34, 3
      %p90 = por %p88, %p89
      %p92 = scmp.ne.s32.totalorder %s77, %s91
      %p93 = scmp.eq.s32.totalorder %s34, 0
      %p94 = por %p92, %p93
      %s96 = sadd.s32 %s95, 1
      %p99 = scmp.eq.s32.totalorder %s28, 3
      %p100 = scmp.ne.s32.totalorder %s95, %s97
      %p101 = scmp.eq.s32.totalorder %s28, 0
      %p102 = por %p100, %p101
      %p103 = scmp.ne.s32.totalorder %s95, %s97
      %p104 = scmp.eq.s32.totalorder %s33, 3
      %p105 = por %p103, %p104
      %p106 = scmp.ne.s32.totalorder %s97, %s98
      %p107 = scmp.eq.s32.totalorder %s33, 0
      %p108 = por %p106, %p107
      %p109 = scmp.ne.s32.totalorder %s97, %s98
      %p110 = scmp.eq.s32.totalorder %s34, 3
      %p111 = por %p109, %p110
      %p113 = scmp.ne.s32.totalorder %s98, %s112
      %p114 = scmp.eq.s32.totalorder %s34, 0
      %p115 = por %p113, %p114
      %s117 = sadd.s32 %s116, 1
      %p120 = scmp.eq.s32.totalorder %s28, 3
      %p121 = scmp.ne.s32.totalorder %s116, %s118
      %p122 = scmp.eq.s32.totalorder %s28, 0
      %p123 = por %p121, %p122
      %p124 = scmp.ne.s32.totalorder %s116, %s118
      %p125 = scmp.eq.s32.totalorder %s33, 3
      %p126 = por %p124, %p125
      %p127 = scmp.ne.s32.totalorder %s118, %s119
      %p128 = scmp.eq.s32.totalorder %s33, 0
      %p129 = por %p127, %p128
      %p130 = scmp.ne.s32.totalorder %s118, %s119
      %p131 = scmp.eq.s32.totalorder %s34, 3
      %p132 = por %p130, %p131
      %p134 = scmp.ne.s32.totalorder %s119, %s133
      %p135 = scmp.eq.s32.totalorder %s34, 0
      %p136 = por %p134, %p135
      %s138 = sadd.s32 %s137, 1
      %p141 = scmp.eq.s32.totalorder %s28, 3
      %p142 = scmp.ne.s32.totalorder %s137, %s139
      %p143 = scmp.eq.s32.totalorder %s28, 0
      %p144 = por %p142, %p143
      %p145 = scmp.ne.s32.totalorder %s137, %s139
      %p146 = scmp.eq.s32.totalorder %s33, 3
      %p147 = por %p145, %p146
      %p148 = scmp.ne.s32.totalorder %s139, %s140
      %p149 = scmp.eq.s32.totalorder %s33, 0
      %p150 = por %p148, %p149
      %p151 = scmp.ne.s32.totalorder %s139, %s140
      %p152 = scmp.eq.s32.totalorder %s34, 3
      %p153 = por %p151, %p152
      %p155 = scmp.ne.s32.totalorder %s140, %s154
      %p156 = scmp.eq.s32.totalorder %s34, 0
      %p157 = por %p155, %p156
      %s158 = ssub.s32 %s36, %s43
      %p159 = scmp.eq.s32.totalorder %s158, 0
      %s161 = sadd.s32 %s160, 1
      %s162 = scalar_select %p159, %s160, %s161
      %p165 = pneg %p159
      %p166 = scmp.eq.s32.totalorder %s28, 3
      %p167 = por %p165, %p166
      %p168 = scmp.ne.s32.totalorder %s160, %s163
      %p169 = scmp.eq.s32.totalorder %s28, 0
      %p170 = por %p168, %p169
      %p171 = scmp.ne.s32.totalorder %s160, %s163
      %p172 = scmp.eq.s32.totalorder %s33, 3
      %p173 = por %p171, %p172
      %p174 = scmp.ne.s32.totalorder %s163, %s164
      %p175 = scmp.eq.s32.totalorder %s33, 0
      %p176 = por %p174, %p175
      %p177 = scmp.ne.s32.totalorder %s163, %s164
      %p178 = scmp.eq.s32.totalorder %s34, 3
      %p179 = por %p177, %p178
      %p181 = scmp.ne.s32.totalorder %s164, %s180
      %p182 = scmp.eq.s32.totalorder %s34, 0
      %p183 = por %p181, %p182
      %s184 = ssub.s32 %s36, %s43
      %p185 = scmp.eq.s32.totalorder %s184, 0
      %s187 = sadd.s32 %s186, 1
      %s188 = scalar_select %p185, %s186, %s187
      %p191 = pneg %p185
      %p192 = scmp.eq.s32.totalorder %s28, 3
      %p193 = por %p191, %p192
      %p194 = scmp.ne.s32.totalorder %s186, %s189
      %p195 = scmp.eq.s32.totalorder %s28, 0
      %p196 = por %p194, %p195
      %p197 = scmp.ne.s32.totalorder %s186, %s189
      %p198 = scmp.eq.s32.totalorder %s33, 3
      %p199 = por %p197, %p198
      %p200 = scmp.ne.s32.totalorder %s189, %s190
      %p201 = scmp.eq.s32.totalorder %s33, 0
      %p202 = por %p200, %p201
      %p203 = scmp.ne.s32.totalorder %s189, %s190
      %p204 = scmp.eq.s32.totalorder %s34, 3
      %p205 = por %p203, %p204
      %p207 = scmp.ne.s32.totalorder %s190, %s206
      %p208 = scmp.eq.s32.totalorder %s34, 0
      %p209 = por %p207, %p208
      %s210 = ssub.s32 %s36, %s43
      %p211 = scmp.eq.s32.totalorder %s210, 0
      %s213 = sadd.s32 %s212, 1
      %s214 = scalar_select %p211, %s212, %s213
      %p217 = pneg %p211
      %p218 = scmp.eq.s32.totalorder %s28, 3
      %p219 = por %p217, %p218
      %p220 = scmp.ne.s32.totalorder %s212, %s215
      %p221 = scmp.eq.s32.totalorder %s28, 0
      %p222 = por %p220, %p221
      %p223 = scmp.ne.s32.totalorder %s212, %s215
      %p224 = scmp.eq.s32.totalorder %s33, 3
      %p225 = por %p223, %p224
      %p226 = scmp.ne.s32.totalorder %s215, %s216
      %p227 = scmp.eq.s32.totalorder %s33, 0
      %p228 = por %p226, %p227
      %p229 = scmp.ne.s32.totalorder %s215, %s216
      %p230 = scmp.eq.s32.totalorder %s34, 3
      %p231 = por %p229, %p230
      %p233 = scmp.ne.s32.totalorder %s216, %s232
      %p234 = scmp.eq.s32.totalorder %s34, 0
      %p235 = por %p233, %p234
      %s236 = ssub.s32 %s36, %s43
      %p237 = scmp.eq.s32.totalorder %s236, 0
      %s239 = sadd.s32 %s238, 1
      %s240 = scalar_select %p237, %s238, %s239
      %p243 = pneg %p237
      %p244 = scmp.eq.s32.totalorder %s28, 3
      %p245 = por %p243, %p244
      %p246 = scmp.ne.s32.totalorder %s238, %s241
      %p247 = scmp.eq.s32.totalorder %s28, 0
      %p248 = por %p246, %p247
      %p249 = scmp.ne.s32.totalorder %s238, %s241
      %p250 = scmp.eq.s32.totalorder %s33, 3
      %p251 = por %p249, %p250
      %p252 = scmp.ne.s32.totalorder %s241, %s242
      %p253 = scmp.eq.s32.totalorder %s33, 0
      %p254 = por %p252, %p253
      %p255 = scmp.ne.s32.totalorder %s241, %s242
      %p256 = scmp.eq.s32.totalorder %s34, 3
      %p257 = por %p255, %p256
      %p259 = scmp.ne.s32.totalorder %s242, %s258
      %p260 = scmp.eq.s32.totalorder %s34, 0
      %p261 = por %p259, %p260
      %s262 = ssub.s32 %s36, %s43
      %p263 = scmp.eq.s32.totalorder %s262, 0
      %s265 = sadd.s32 %s264, 1
      %s266 = scalar_select %p263, %s264, %s265
      %p269 = pneg %p263
      %p270 = scmp.eq.s32.totalorder %s28, 3
      %p271 = por %p269, %p270
      %p272 = scmp.ne.s32.totalorder %s264, %s267
      %p273 = scmp.eq.s32.totalorder %s28, 0
      %p274 = por %p272, %p273
      %p275 = scmp.ne.s32.totalorder %s264, %s267
      %p276 = scmp.eq.s32.totalorder %s33, 3
      %p277 = por %p275, %p276
      %p278 = scmp.ne.s32.totalorder %s267, %s268
      %p279 = scmp.eq.s32.totalorder %s33, 0
      %p280 = por %p278, %p279
      %p281 = scmp.ne.s32.totalorder %s267, %s268
      %p282 = scmp.eq.s32.totalorder %s34, 3
      %p283 = por %p281, %p282
      %p285 = scmp.ne.s32.totalorder %s268, %s284
      %p286 = scmp.eq.s32.totalorder %s34, 0
      %p287 = por %p285, %p286
      %s288 = ssub.s32 %s36, %s43
      %p289 = scmp.eq.s32.totalorder %s288, 0
      %s291 = sadd.s32 %s290, 1
      %s292 = scalar_select %p289, %s290, %s291
      %p295 = pneg %p289
      %p296 = scmp.eq.s32.totalorder %s28, 3
      %p297 = por %p295, %p296
      %p298 = scmp.ne.s32.totalorder %s290, %s293
      %p299 = scmp.eq.s32.totalorder %s28, 0
      %p300 = por %p298, %p299
      %p301 = scmp.ne.s32.totalorder %s290, %s293
      %p302 = scmp.eq.s32.totalorder %s33, 3
      %p303 = por %p301, %p302
      %p304 = scmp.ne.s32.totalorder %s293, %s294
      %p305 = scmp.eq.s32.totalorder %s33, 0
      %p306 = por %p304, %p305
      %p307 = scmp.ne.s32.totalorder %s293, %s294
      %p308 = scmp.eq.s32.totalorder %s34, 3
      %p309 = por %p307, %p308
      %p311 = scmp.ne.s32.totalorder %s294, %s310
      %p312 = scmp.eq.s32.totalorder %s34, 0
      %p313 = por %p311, %p312
      %s314 = ssub.s32 %s36, %s43
      %p315 = scmp.eq.s32.totalorder %s314, 0
      %s317 = sadd.s32 %s316, 1
      %s318 = scalar_select %p315, %s316, %s317
      %p321 = pneg %p315
      %p322 = scmp.eq.s32.totalorder %s28, 3
      %p323 = por %p321, %p322
      %p324 = scmp.ne.s32.totalorder %s316, %s319
      %p325 = scmp.eq.s32.totalorder %s28, 0
      %p326 = por %p324, %p325
      %p327 = scmp.ne.s32.totalorder %s316, %s319
      %p328 = scmp.eq.s32.totalorder %s33, 3
      %p329 = por %p327, %p328
      %p330 = scmp.ne.s32.totalorder %s319, %s320
      %p331 = scmp.eq.s32.totalorder %s33, 0
      %p332 = por %p330, %p331
      %p333 = scmp.ne.s32.totalorder %s319, %s320
      %p334 = scmp.eq.s32.totalorder %s34, 3
      %p335 = por %p333, %p334
      %p337 = scmp.ne.s32.totalorder %s320, %s336
      %p338 = scmp.eq.s32.totalorder %s34, 0
      %p339 = por %p337, %p338
      %s340 = ssub.s32 %s36, %s43
      %p341 = scmp.eq.s32.totalorder %s340, 0
      %s343 = sadd.s32 %s342, 1
      %s344 = scalar_select %p341, %s342, %s343
      %p347 = pneg %p341
      %p348 = scmp.eq.s32.totalorder %s28, 3
      %p349 = por %p347, %p348
      %p350 = scmp.ne.s32.totalorder %s342, %s345
      %p351 = scmp.eq.s32.totalorder %s28, 0
      %p352 = por %p350, %p351
      %p353 = scmp.ne.s32.totalorder %s342, %s345
      %p354 = scmp.eq.s32.totalorder %s33, 3
      %p355 = por %p353, %p354
      %p356 = scmp.ne.s32.totalorder %s345, %s346
      %p357 = scmp.eq.s32.totalorder %s33, 0
      %p358 = por %p356, %p357
      %p359 = scmp.ne.s32.totalorder %s345, %s346
      %p360 = scmp.eq.s32.totalorder %s34, 3
      %p361 = por %p359, %p360
      %p363 = scmp.ne.s32.totalorder %s346, %s362
      %p364 = scmp.eq.s32.totalorder %s34, 0
      %p365 = por %p363, %p364
      %s366 = ssub.s32 %s36, %s43
      %p367 = scmp.eq.s32.totalorder %s366, 0
      %s369 = sadd.s32 %s368, 1
      %s370 = scalar_select %p367, %s368, %s369
      %p373 = pneg %p367
      %p374 = scmp.eq.s32.totalorder %s28, 3
      %p375 = por %p373, %p374
      %p376 = scmp.ne.s32.totalorder %s368, %s371
      %p377 = scmp.eq.s32.totalorder %s28, 0
      %p378 = por %p376, %p377
      %p379 = scmp.ne.s32.totalorder %s368, %s371
      %p380 = scmp.eq.s32.totalorder %s33, 3
      %p381 = por %p379, %p380
      %p382 = scmp.ne.s32.totalorder %s371, %s372
      %p383 = scmp.eq.s32.totalorder %s33, 0
      %p384 = por %p382, %p383
      %p385 = scmp.ne.s32.totalorder %s371, %s372
      %p386 = scmp.eq.s32.totalorder %s34, 3
      %p387 = por %p385, %p386
      %p389 = scmp.ne.s32.totalorder %s372, %s388
      %p390 = scmp.eq.s32.totalorder %s34, 0
      %p391 = por %p389, %p390
      %s392 = ssub.s32 %s36, %s43
      %p393 = scmp.eq.s32.totalorder %s392, 0
      %s395 = sadd.s32 %s394, 1
      %s396 = scalar_select %p393, %s394, %s395
      %p399 = pneg %p393
      %p400 = scmp.eq.s32.totalorder %s28, 3
      %p401 = por %p399, %p400
      %p402 = scmp.ne.s32.totalorder %s394, %s397
      %p403 = scmp.eq.s32.totalorder %s28, 0
      %p404 = por %p402, %p403
      %p405 = scmp.ne.s32.totalorder %s394, %s397
      %p406 = scmp.eq.s32.totalorder %s33, 3
      %p407 = por %p405, %p406
      %p408 = scmp.ne.s32.totalorder %s397, %s398
      %p409 = scmp.eq.s32.totalorder %s33, 0
      %p410 = por %p408, %p409
      %p411 = scmp.ne.s32.totalorder %s397, %s398
      %p412 = scmp.eq.s32.totalorder %s34, 3
      %p413 = por %p411, %p412
      %p415 = scmp.ne.s32.totalorder %s398, %s414
      %p416 = scmp.eq.s32.totalorder %s34, 0
      %p417 = por %p415, %p416
      %s418 = ssub.s32 %s36, %s43
      %p419 = scmp.eq.s32.totalorder %s418, 0
      %s421 = sadd.s32 %s420, 1
      %s422 = scalar_select %p419, %s420, %s421
      %p425 = pneg %p419
      %p426 = scmp.eq.s32.totalorder %s28, 3
      %p427 = por %p425, %p426
      %p428 = scmp.ne.s32.totalorder %s420, %s423
      %p429 = scmp.eq.s32.totalorder %s28, 0
      %p430 = por %p428, %p429
      %p431 = scmp.ne.s32.totalorder %s420, %s423
      %p432 = scmp.eq.s32.totalorder %s33, 3
      %p433 = por %p431, %p432
      %p434 = scmp.ne.s32.totalorder %s423, %s424
      %p435 = scmp.eq.s32.totalorder %s33, 0
      %p436 = por %p434, %p435
      %p437 = scmp.ne.s32.totalorder %s423, %s424
      %p438 = scmp.eq.s32.totalorder %s34, 3
      %p439 = por %p437, %p438
      %p441 = scmp.ne.s32.totalorder %s424, %s440
      %p442 = scmp.eq.s32.totalorder %s34, 0
      %p443 = por %p441, %p442
      %s444 = ssub.s32 %s36, %s43
      %p445 = scmp.eq.s32.totalorder %s444, 0
      %s447 = sadd.s32 %s446, 1
      %s448 = scalar_select %p445, %s446, %s447
      %p451 = pneg %p445
      %p452 = scmp.eq.s32.totalorder %s28, 3
      %p453 = por %p451, %p452
      %p454 = scmp.ne.s32.totalorder %s446, %s449
      %p455 = scmp.eq.s32.totalorder %s28, 0
      %p456 = por %p454, %p455
      %p457 = scmp.ne.s32.totalorder %s446, %s449
      %p458 = scmp.eq.s32.totalorder %s33, 3
      %p459 = por %p457, %p458
      %p460 = scmp.ne.s32.totalorder %s449, %s450
      %p461 = scmp.eq.s32.totalorder %s33, 0
      %p462 = por %p460, %p461
      %p463 = scmp.ne.s32.totalorder %s449, %s450
      %p464 = scmp.eq.s32.totalorder %s34, 3
      %p465 = por %p463, %p464
      %p467 = scmp.ne.s32.totalorder %s450, %s466
      %p468 = scmp.eq.s32.totalorder %s34, 0
      %p469 = por %p467, %p468
      %s471 = sadd.s32 %s470, 1
      %p474 = scmp.eq.s32.totalorder %s28, 3
      %p475 = scmp.ne.s32.totalorder %s470, %s472
      %p476 = scmp.eq.s32.totalorder %s28, 0
      %p477 = por %p475, %p476
      %p478 = scmp.ne.s32.totalorder %s470, %s472
      %p479 = scmp.eq.s32.totalorder %s33, 3
      %p480 = por %p478, %p479
      %p481 = scmp.ne.s32.totalorder %s472, %s473
      %p482 = scmp.eq.s32.totalorder %s33, 0
      %p483 = por %p481, %p482
      %p484 = scmp.ne.s32.totalorder %s472, %s473
      %p485 = scmp.eq.s32.totalorder %s34, 3
      %p486 = por %p484, %p485
      %p488 = scmp.ne.s32.totalorder %s473, %s487
      %p489 = scmp.eq.s32.totalorder %s34, 0
      %p490 = por %p488, %p489
      %s492 = sadd.s32 %s491, 1
      %p495 = scmp.eq.s32.totalorder %s28, 3
      %p496 = scmp.ne.s32.totalorder %s491, %s493
      %p497 = scmp.eq.s32.totalorder %s28, 0
      %p498 = por %p496, %p497
      %p499 = scmp.ne.s32.totalorder %s491, %s493
      %p500 = scmp.eq.s32.totalorder %s33, 3
      %p501 = por %p499, %p500
      %p502 = scmp.ne.s32.totalorder %s493, %s494
      %p503 = scmp.eq.s32.totalorder %s33, 0
      %p504 = por %p502, %p503
      %p505 = scmp.ne.s32.totalorder %s493, %s494
      %p506 = scmp.eq.s32.totalorder %s34, 3
      %p507 = por %p505, %p506
      %p509 = scmp.ne.s32.totalorder %s494, %s508
      %p510 = scmp.eq.s32.totalorder %s34, 0
      %p511 = por %p509, %p510
      %s512 = ssub.s32 %s35, %s47
      %p513 = scmp.eq.s32.totalorder %s512, 0
      %s515 = sadd.s32 %s514, 1
      %s516 = scalar_select %p513, %s514, %s515
      %p519 = pneg %p513
      %p520 = scmp.eq.s32.totalorder %s28, 3
      %p521 = por %p519, %p520
      %p522 = scmp.ne.s32.totalorder %s514, %s517
      %p523 = scmp.eq.s32.totalorder %s28, 0
      %p524 = por %p522, %p523
      %p525 = scmp.ne.s32.totalorder %s514, %s517
      %p526 = scmp.eq.s32.totalorder %s33, 3
      %p527 = por %p525, %p526
      %p528 = scmp.ne.s32.totalorder %s517, %s518
      %p529 = scmp.eq.s32.totalorder %s33, 0
      %p530 = por %p528, %p529
      %p531 = scmp.ne.s32.totalorder %s517, %s518
      %p532 = scmp.eq.s32.totalorder %s34, 3
      %p533 = por %p531, %p532
      %p535 = scmp.ne.s32.totalorder %s518, %s534
      %p536 = scmp.eq.s32.totalorder %s34, 0
      %p537 = por %p535, %p536
      %p538 = scmp.le.s32.totalorder 1, %s28
      %p539 = scmp.lt.s32.totalorder %s28, 5
      %p540 = pnand %p538, %p539
      %p541 = pneg %p540
      // Predicated region
      $region9: #{tpu_custom_call.1} parent=5 // pred_check
        _
      $region10: #{tpu_custom_call.1} parent=5 // pred_check_branch
        %543 = sbr.rel (%p540) target = $region12
      $region11: #{tpu_custom_call.1} parent=5 // pred_region
        %s544 = ssub.s32 %s28, 1
        // Predicated region
        $region13: #{tpu_custom_call.1} parent=11 // pred_check
          %p545 = pneg %p87
        $region14: #{tpu_custom_call.1} parent=11 // pred_check_branch
          %547 = sbr.rel (%p545) target = $region16
        $region15: #{tpu_custom_call.1} parent=11 // pred_region
          _
        $region16: #{tpu_custom_call.1} parent=11 // pred_fallthru
          _
        // Predicated region
        $region17: #{tpu_custom_call.1} parent=11 // pred_check
          %p548 = pneg %p108
        $region18: #{tpu_custom_call.1} parent=11 // pred_check_branch
          %550 = sbr.rel (%p548) target = $region20
        $region19: #{tpu_custom_call.1} parent=11 // pred_region
          _
        $region20: #{tpu_custom_call.1} parent=11 // pred_fallthru
          _
        // Predicated region
        $region21: #{tpu_custom_call.1} parent=11 // pred_check
          %p551 = pneg %p129
        $region22: #{tpu_custom_call.1} parent=11 // pred_check_branch
          %553 = sbr.rel (%p551) target = $region24
        $region23: #{tpu_custom_call.1} parent=11 // pred_region
          _
        $region24: #{tpu_custom_call.1} parent=11 // pred_fallthru
          _
        // Predicated region
        $region25: #{tpu_custom_call.1} parent=11 // pred_check
          %p554 = pneg %p150
        $region26: #{tpu_custom_call.1} parent=11 // pred_check_branch
          %556 = sbr.rel (%p554) target = $region28
        $region27: #{tpu_custom_call.1} parent=11 // pred_region
          _
        $region28: #{tpu_custom_call.1} parent=11 // pred_fallthru
          _
        // Predicated region
        $region29: #{tpu_custom_call.1} parent=11 // pred_check
          %p557 = pneg %p483
        $region30: #{tpu_custom_call.1} parent=11 // pred_check_branch
          %559 = sbr.rel (%p557) target = $region32
        $region31: #{tpu_custom_call.1} parent=11 // pred_region
          _
        $region32: #{tpu_custom_call.1} parent=11 // pred_fallthru
          _
        // Predicated region
        $region33: #{tpu_custom_call.1} parent=11 // pred_check
          %p560 = pneg %p504
        $region34: #{tpu_custom_call.1} parent=11 // pred_check_branch
          %562 = sbr.rel (%p560) target = $region36
        $region35: #{tpu_custom_call.1} parent=11 // pred_region
          _
        $region36: #{tpu_custom_call.1} parent=11 // pred_fallthru
          _
      $region12: #{tpu_custom_call.1} parent=5 // pred_fallthru
        _
      %p563 = scmp.lt.s32.totalorder %s28, 4
      // Predicated region
      $region37: #{tpu_custom_call.1} parent=5 // pred_check
        %p564 = pneg %p563
      $region38: #{tpu_custom_call.1} parent=5 // pred_check_branch
        %566 = sbr.rel (%p564) target = $region40
      $region39: #{tpu_custom_call.1} parent=5 // pred_region
        // Predicated region
        $region41: #{tpu_custom_call.1} parent=39 // pred_check
          %p567 = pneg %p60
        $region42: #{tpu_custom_call.1} parent=39 // pred_check_branch
          %569 = sbr.rel (%p567) target = $region44
        $region43: #{tpu_custom_call.1} parent=39 // pred_region
          %p570 = scmp.lt.s32.totalorder %s35, 1
          %s571 = scalar_select %p570, %s35, 1
          %s572 = smul.addr %s571, 2
          %s573 = smul.addr %s572, 2
          %s574 = scalar_lea.vmem %s0, %s573
        $region44: #{tpu_custom_call.1} parent=39 // pred_fallthru
          _
        // Predicated region
        $region45: #{tpu_custom_call.1} parent=39 // pred_check
          %p575 = pneg %p170
        $region46: #{tpu_custom_call.1} parent=39 // pred_check_branch
          %577 = sbr.rel (%p575) target = $region48
        $region47: #{tpu_custom_call.1} parent=39 // pred_region
          %p578 = scmp.lt.s32.totalorder %s36, 1
          %s579 = scalar_select %p578, %s36, 1
          %s580 = scalar_lea.vmem %s5, %s579
        $region48: #{tpu_custom_call.1} parent=39 // pred_fallthru
          _
        // Predicated region
        $region49: #{tpu_custom_call.1} parent=39 // pred_check
          %p581 = pneg %p196
        $region50: #{tpu_custom_call.1} parent=39 // pred_check_branch
          %583 = sbr.rel (%p581) target = $region52
        $region51: #{tpu_custom_call.1} parent=39 // pred_region
          %p584 = scmp.lt.s32.totalorder %s36, 1
          %s585 = scalar_select %p584, %s36, 1
          %s586 = scalar_lea.vmem %s6, %s585
        $region52: #{tpu_custom_call.1} parent=39 // pred_fallthru
          _
        // Predicated region
        $region53: #{tpu_custom_call.1} parent=39 // pred_check
          %p587 = pneg %p222
        $region54: #{tpu_custom_call.1} parent=39 // pred_check_branch
          %589 = sbr.rel (%p587) target = $region56
        $region55: #{tpu_custom_call.1} parent=39 // pred_region
          %p590 = scmp.lt.s32.totalorder %s36, 1
          %s591 = scalar_select %p590, %s36, 1
          %s592 = smul.addr %s591, 4
          %s593 = smul.addr %s592, 4
          %s594 = scalar_lea.vmem %s7, %s593
        $region56: #{tpu_custom_call.1} parent=39 // pred_fallthru
          _
        // Predicated region
        $region57: #{tpu_custom_call.1} parent=39 // pred_check
          %p595 = pneg %p248
        $region58: #{tpu_custom_call.1} parent=39 // pred_check_branch
          %597 = sbr.rel (%p595) target = $region60
        $region59: #{tpu_custom_call.1} parent=39 // pred_region
          %p598 = scmp.lt.s32.totalorder %s36, 1
          %s599 = scalar_select %p598, %s36, 1
          %s600 = scalar_lea.vmem %s8, %s599
        $region60: #{tpu_custom_call.1} parent=39 // pred_fallthru
          _
        // Predicated region
        $region61: #{tpu_custom_call.1} parent=39 // pred_check
          %p601 = pneg %p274
        $region62: #{tpu_custom_call.1} parent=39 // pred_check_branch
          %603 = sbr.rel (%p601) target = $region64
        $region63: #{tpu_custom_call.1} parent=39 // pred_region
          %p604 = scmp.lt.s32.totalorder %s36, 1
          %s605 = scalar_select %p604, %s36, 1
          %s606 = smul.addr %s605, 4
          %s607 = smul.addr %s606, 4
          %s608 = scalar_lea.vmem %s9, %s607
        $region64: #{tpu_custom_call.1} parent=39 // pred_fallthru
          _
        // Predicated region
        $region65: #{tpu_custom_call.1} parent=39 // pred_check
          %p609 = pneg %p300
        $region66: #{tpu_custom_call.1} parent=39 // pred_check_branch
          %611 = sbr.rel (%p609) target = $region68
        $region67: #{tpu_custom_call.1} parent=39 // pred_region
          %p612 = scmp.lt.s32.totalorder %s36, 1
          %s613 = scalar_select %p612, %s36, 1
          %s614 = scalar_lea.vmem %s10, %s613
        $region68: #{tpu_custom_call.1} parent=39 // pred_fallthru
          _
        // Predicated region
        $region69: #{tpu_custom_call.1} parent=39 // pred_check
          %p615 = pneg %p326
        $region70: #{tpu_custom_call.1} parent=39 // pred_check_branch
          %617 = sbr.rel (%p615) target = $region72
        $region71: #{tpu_custom_call.1} parent=39 // pred_region
          %p618 = scmp.lt.s32.totalorder %s36, 1
          %s619 = scalar_select %p618, %s36, 1
          %s620 = scalar_lea.vmem %s11, %s619
        $region72: #{tpu_custom_call.1} parent=39 // pred_fallthru
          _
        // Predicated region
        $region73: #{tpu_custom_call.1} parent=39 // pred_check
          %p621 = pneg %p352
        $region74: #{tpu_custom_call.1} parent=39 // pred_check_branch
          %623 = sbr.rel (%p621) target = $region76
        $region75: #{tpu_custom_call.1} parent=39 // pred_region
          %p624 = scmp.lt.s32.totalorder %s36, 1
          %s625 = scalar_select %p624, %s36, 1
          %s626 = scalar_lea.vmem %s12, %s625
        $region76: #{tpu_custom_call.1} parent=39 // pred_fallthru
          _
        // Predicated region
        $region77: #{tpu_custom_call.1} parent=39 // pred_check
          %p627 = pneg %p378
        $region78: #{tpu_custom_call.1} parent=39 // pred_check_branch
          %629 = sbr.rel (%p627) target = $region80
        $region79: #{tpu_custom_call.1} parent=39 // pred_region
          %p630 = scmp.lt.s32.totalorder %s36, 1
          %s631 = scalar_select %p630, %s36, 1
          %s632 = smul.addr %s631, 4
          %s633 = smul.addr %s632, 4
          %s634 = scalar_lea.vmem %s13, %s633
        $region80: #{tpu_custom_call.1} parent=39 // pred_fallthru
          _
        // Predicated region
        $region81: #{tpu_custom_call.1} parent=39 // pred_check
          %p635 = pneg %p404
        $region82: #{tpu_custom_call.1} parent=39 // pred_check_branch
          %637 = sbr.rel (%p635) target = $region84
        $region83: #{tpu_custom_call.1} parent=39 // pred_region
          %p638 = scmp.lt.s32.totalorder %s36, 1
          %s639 = scalar_select %p638, %s36, 1
          %s640 = scalar_lea.vmem %s14, %s639
        $region84: #{tpu_custom_call.1} parent=39 // pred_fallthru
          _
        // Predicated region
        $region85: #{tpu_custom_call.1} parent=39 // pred_check
          %p641 = pneg %p430
        $region86: #{tpu_custom_call.1} parent=39 // pred_check_branch
          %643 = sbr.rel (%p641) target = $region88
        $region87: #{tpu_custom_call.1} parent=39 // pred_region
          %p644 = scmp.lt.s32.totalorder %s36, 1
          %s645 = scalar_select %p644, %s36, 1
          %s646 = smul.addr %s645, 8
          %s647 = smul.addr %s646, 4
          %s648 = scalar_lea.vmem %s15, %s647
        $region88: #{tpu_custom_call.1} parent=39 // pred_fallthru
          _
        // Predicated region
        $region89: #{tpu_custom_call.1} parent=39 // pred_check
          %p649 = pneg %p456
        $region90: #{tpu_custom_call.1} parent=39 // pred_check_branch
          %651 = sbr.rel (%p649) target = $region92
        $region91: #{tpu_custom_call.1} parent=39 // pred_region
          %p652 = scmp.lt.s32.totalorder %s36, 1
          %s653 = scalar_select %p652, %s36, 1
          %s654 = scalar_lea.vmem %s16, %s653
        $region92: #{tpu_custom_call.1} parent=39 // pred_fallthru
          _
      $region40: #{tpu_custom_call.1} parent=5 // pred_fallthru
        _
      %p655 = scmp.le.s32.totalorder 1, %s28
      %p656 = scmp.lt.s32.totalorder %s28, 5
      %p657 = pnand %p655, %p656
      %p658 = pneg %p657
      // Predicated region
      $region93: #{tpu_custom_call.1} parent=5 // pred_check
        _
      $region94: #{tpu_custom_call.1} parent=5 // pred_check_branch
        %660 = sbr.rel (%p657) target = $region96
      $region95: #{tpu_custom_call.1} parent=5 // pred_region
        %s661 = ssub.s32 %s28, 1
        %p662 = scmp.lt.s32.totalorder %s37, 1
        %s663 = scalar_select %p662, %s37, 1
        %s664 = smul.addr %s663, 2
        %s665 = smul.addr %s664, 2
        %s666 = scalar_lea.vmem %s0, %s665
        %p667 = pneg %p66
        %p668 = pneg %p63
        %p669 = pneg %p87
        %p670 = pneg %p84
        %p671 = pneg %p108
        %p672 = pneg %p105
        %p673 = pneg %p129
        %p674 = pneg %p126
        %p675 = pneg %p150
        %p676 = pneg %p147
        %p677 = scmp.lt.s32.totalorder %s38, 1
        %s678 = scalar_select %p677, %s38, 1
        %s679 = scalar_lea.vmem %s5, %s678
        %p680 = pneg %p176
        %p681 = pneg %p173
        %p682 = scmp.lt.s32.totalorder %s38, 1
        %s683 = scalar_select %p682, %s38, 1
        %s684 = scalar_lea.vmem %s6, %s683
        %p685 = pneg %p202
        %p686 = pneg %p199
        %p687 = scmp.lt.s32.totalorder %s38, 1
        %s688 = scalar_select %p687, %s38, 1
        %s689 = smul.addr %s688, 4
        %s690 = smul.addr %s689, 4
        %s691 = scalar_lea.vmem %s7, %s690
        %p692 = pneg %p228
        %p693 = pneg %p225
        %p694 = scmp.lt.s32.totalorder %s38, 1
        %s695 = scalar_select %p694, %s38, 1
        %s696 = scalar_lea.vmem %s8, %s695
        %p697 = pneg %p254
        %p698 = pneg %p251
        %p699 = scmp.lt.s32.totalorder %s38, 1
        %s700 = scalar_select %p699, %s38, 1
        %s701 = smul.addr %s700, 4
        %s702 = smul.addr %s701, 4
        %s703 = scalar_lea.vmem %s9, %s702
        %p704 = pneg %p280
        %p705 = pneg %p277
        %p706 = scmp.lt.s32.totalorder %s38, 1
        %s707 = scalar_select %p706, %s38, 1
        %s708 = scalar_lea.vmem %s10, %s707
        %p709 = pneg %p306
        %p710 = pneg %p303
        %p711 = scmp.lt.s32.totalorder %s38, 1
        %s712 = scalar_select %p711, %s38, 1
        %s713 = scalar_lea.vmem %s11, %s712
        %p714 = pneg %p332
        %p715 = pneg %p329
        %p716 = scmp.lt.s32.totalorder %s38, 1
        %s717 = scalar_select %p716, %s38, 1
        %s718 = scalar_lea.vmem %s12, %s717
        %p719 = pneg %p358
        %p720 = pneg %p355
        %p721 = scmp.lt.s32.totalorder %s38, 1
        %s722 = scalar_select %p721, %s38, 1
        %s723 = smul.addr %s722, 4
        %s724 = smul.addr %s723, 4
        %s725 = scalar_lea.vmem %s13, %s724
        %p726 = pneg %p384
        %p727 = pneg %p381
        %p728 = scmp.lt.s32.totalorder %s38, 1
        %s729 = scalar_select %p728, %s38, 1
        %s730 = scalar_lea.vmem %s14, %s729
        %p731 = pneg %p410
        %p732 = pneg %p407
        %p733 = scmp.lt.s32.totalorder %s38, 1
        %s734 = scalar_select %p733, %s38, 1
        %s735 = smul.addr %s734, 8
        %s736 = smul.addr %s735, 4
        %s737 = scalar_lea.vmem %s15, %s736
        %p738 = pneg %p436
        %p739 = pneg %p433
        %p740 = scmp.lt.s32.totalorder %s38, 1
        %s741 = scalar_select %p740, %s38, 1
        %s742 = scalar_lea.vmem %s16, %s741
        %p743 = pneg %p462
        %p744 = pneg %p459
        %p745 = pneg %p483
        %p746 = pneg %p480
        %p747 = pneg %p504
        %p748 = pneg %p501
        %p749 = pneg %p530
        %p750 = pneg %p527
        %s751 = sand.u32 %s517, 1
        %s752 = scalar_lea.sflag [#allocation5], %s751
        %s753 = sand.u32 %s517, 1
        %s754 = scalar_lea.vmem [#allocation4], %s753
        %p755 = scmp.lt.s32.totalorder %s37, 1
        %s756 = scalar_select %p755, %s37, 1
        %s757 = smul.addr %s756, 2
        %s758 = smul.addr %s757, 2
        %s759 = scalar_lea.vmem %s0, %s758
        %p760 = scmp.lt.s32.totalorder %s38, 1
        %s761 = scalar_select %p760, %s38, 1
        %s762 = scalar_lea.vmem %s5, %s761
        %p763 = scmp.lt.s32.totalorder %s38, 1
        %s764 = scalar_select %p763, %s38, 1
        %s765 = scalar_lea.vmem %s6, %s764
        %p766 = scmp.lt.s32.totalorder %s38, 1
        %s767 = scalar_select %p766, %s38, 1
        %s768 = smul.addr %s767, 4
        %s769 = smul.addr %s768, 4
        %s770 = scalar_lea.vmem %s7, %s769
        %p771 = scmp.lt.s32.totalorder %s38, 1
        %s772 = scalar_select %p771, %s38, 1
        %s773 = scalar_lea.vmem %s8, %s772
        %p774 = scmp.lt.s32.totalorder %s38, 1
        %s775 = scalar_select %p774, %s38, 1
        %s776 = smul.addr %s775, 4
        %s777 = smul.addr %s776, 4
        %s778 = scalar_lea.vmem %s9, %s777
        %p779 = scmp.lt.s32.totalorder %s38, 1
        %s780 = scalar_select %p779, %s38, 1
        %s781 = scalar_lea.vmem %s10, %s780
        %p782 = scmp.lt.s32.totalorder %s38, 1
        %s783 = scalar_select %p782, %s38, 1
        %s784 = scalar_lea.vmem %s11, %s783
        %p785 = scmp.lt.s32.totalorder %s38, 1
        %s786 = scalar_select %p785, %s38, 1
        %s787 = scalar_lea.vmem %s12, %s786
        %p788 = scmp.lt.s32.totalorder %s38, 1
        %s789 = scalar_select %p788, %s38, 1
        %s790 = smul.addr %s789, 4
        %s791 = smul.addr %s790, 4
        %s792 = scalar_lea.vmem %s13, %s791
        %p793 = scmp.lt.s32.totalorder %s38, 1
        %s794 = scalar_select %p793, %s38, 1
        %s795 = scalar_lea.vmem %s14, %s794
        %p796 = scmp.lt.s32.totalorder %s38, 1
        %s797 = scalar_select %p796, %s38, 1
        %s798 = smul.addr %s797, 8
        %s799 = smul.addr %s798, 4
        %s800 = scalar_lea.vmem %s15, %s799
        %p801 = scmp.lt.s32.totalorder %s38, 1
        %s802 = scalar_select %p801, %s38, 1
        %s803 = scalar_lea.vmem %s16, %s802
        %p805 = scmp.eq.s32.totalorder %s38, 0
        // Predicated region
        $region97: #{tpu_custom_call.1} parent=95 // pred_check
          %p806 = pneg %p805
        $region98: #{tpu_custom_call.1} parent=95 // pred_check_branch
          %808 = sbr.rel (%p806) target = $region100
        $region99: #{tpu_custom_call.1} parent=95 // pred_region
          %v809 = vld [vmem:[%s759] sm:$0xf]
          %v810 = vld [vmem:[%s1] sm:$0xf]
          %v811 = vld [vmem:[%s1 + $0x4] sm:$0xf]
          %v812 = vld [vmem:[%s1 + $0x8] sm:$0xf]
          %v813 = vld [vmem:[%s1 + $0xc] sm:$0xf]
          %v814 = vld [vmem:[%s1 + $0x10] sm:$0xf]
          %v815 = vld [vmem:[%s1 + $0x14] sm:$0xf]
          %v816 = vld [vmem:[%s1 + $0x18] sm:$0xf]
          %v817 = vld [vmem:[%s1 + $0x1c] sm:$0xf]
          %v818 = vld [vmem:[%s1 + $0x20] sm:$0xf]
          %v819 = vld [vmem:[%s1 + $0x24] sm:$0xf]
          %v820 = vld [vmem:[%s1 + $0x28] sm:$0xf]
          %v821 = vld [vmem:[%s1 + $0x2c] sm:$0xf]
          %v822 = vld [vmem:[%s1 + $0x30] sm:$0xf]
          %v823 = vld [vmem:[%s1 + $0x34] sm:$0xf]
          %v824 = vld [vmem:[%s1 + $0x38] sm:$0xf]
          %v825 = vld [vmem:[%s1 + $0x3c] sm:$0xf]
          %v826 = vld [vmem:[%s1 + $0x40] sm:$0xf]
          %v827 = vld [vmem:[%s1 + $0x44] sm:$0xf]
          %v828 = vld [vmem:[%s1 + $0x48] sm:$0xf]
          %v829 = vld [vmem:[%s1 + $0x4c] sm:$0xf]
          %v830 = vld [vmem:[%s1 + $0x50] sm:$0xf]
          %v831 = vld [vmem:[%s1 + $0x54] sm:$0xf]
          %v832 = vld [vmem:[%s1 + $0x58] sm:$0xf]
          %v833 = vld [vmem:[%s1 + $0x5c] sm:$0xf]
          %v834 = vld [vmem:[%s2] sm:$0x1]
          %v836 = vlaneseq
          %v837 = vshrl.u32 %v836, 7
          %v838 = vsub.s32 0, %v837
          %v839 = vrot.slane %v834, %v838
          %v843 = vunpack.c.l.s4 1983009808
          %v844 = vunpack.c.0.s8 %v843
          %v845 = vlaneseq
          %v846 = vshrl.u32 %v845, 7
          %v847 = vsub.s32 %v844, %v846
          %v848 = vrot.slane %v809, %v847
          %v849 = vcombine.high %v848, %v848
          %v875 = vunpack.c.l.b16 %v810
          %v876 = vunpack.c.l.b16 %v811
          %v877 = vunpack.c.l.b16 %v812
          %v878 = vunpack.c.l.b16 %v813
          %v879 = vunpack.c.l.b16 %v814
          %v880 = vunpack.c.l.b16 %v815
          %v881 = vunpack.c.l.b16 %v816
          %v882 = vunpack.c.l.b16 %v817
          %v883 = vunpack.c.l.b16 %v818
          %v884 = vunpack.c.l.b16 %v819
          %v885 = vunpack.c.l.b16 %v820
          %v886 = vunpack.c.l.b16 %v821
          %v887 = vunpack.c.l.b16 %v822
          %v888 = vunpack.c.l.b16 %v823
          %v889 = vunpack.c.l.b16 %v824
          %v890 = vunpack.c.l.b16 %v825
          %v891 = vunpack.c.l.b16 %v826
          %v892 = vunpack.c.l.b16 %v827
          %v893 = vunpack.c.l.b16 %v828
          %v894 = vunpack.c.l.b16 %v829
          %v895 = vunpack.c.l.b16 %v830
          %v896 = vunpack.c.l.b16 %v831
          %v897 = vunpack.c.l.b16 %v832
          %v898 = vunpack.c.l.b16 %v833
          %v899 = vpack.c.b16 %v876, %v875
          %v900 = vpack.c.b16 %v878, %v877
          %v901 = vpack.c.b16 %v880, %v879
          %v902 = vpack.c.b16 %v882, %v881
          %v903 = vpack.c.b16 %v884, %v883
          %v904 = vpack.c.b16 %v886, %v885
          %v905 = vpack.c.b16 %v888, %v887
          %v906 = vpack.c.b16 %v890, %v889
          %v907 = vpack.c.b16 %v892, %v891
          %v908 = vpack.c.b16 %v894, %v893
          %v909 = vpack.c.b16 %v896, %v895
          %v910 = vpack.c.b16 %v898, %v897
          %vm923 = vcmask 523264
          %v925 = vsel %vm923, %v849, 0
          %927 = vmatprep.subr.bf16.mxu0 0
          %928 = vmatpush1.bf16.msra.mxu0 %v899
          %929 = vmatprep.subr.bf16.mxu0 0
          %930 = vmatpush1.bf16.msra.mxu0 %v900
          %931 = vmatprep.subr.bf16.mxu0 0
          %932 = vmatpush1.bf16.msra.mxu0 %v901
          %933 = vmatprep.subr.bf16.mxu0 0
          %934 = vmatpush1.bf16.msra.mxu0 %v902
          %935 = vmatprep.subr.bf16.mxu0 0
          %936 = vmatpush1.bf16.msra.mxu0 %v903
          %937 = vmatprep.subr.bf16.mxu0 0
          %938 = vmatpush1.bf16.msra.mxu0 %v904
          %939 = vmatprep.subr.bf16.mxu0 0
          %940 = vmatpush1.bf16.msra.mxu0 %v905
          %941 = vmatprep.subr.bf16.mxu0 0
          %942 = vmatpush1.bf16.msra.mxu0 %v906
          %943 = vmatprep.subr.bf16.mxu0 0
          %944 = vmatpush1.bf16.msra.mxu0 %v907
          %945 = vmatprep.subr.bf16.mxu0 0
          %946 = vmatpush1.bf16.msra.mxu0 %v908
          %947 = vmatprep.subr.bf16.mxu0 0
          %948 = vmatpush1.bf16.msra.mxu0 %v909
          %949 = vmatprep.subr.bf16.mxu0 0
          %950 = vmatpush1.bf16.msra.mxu0 %v910
          %951 = vmatprep.subr.bf16.mxu0 0
          %952 = vmatpush1.bf16.msra.mxu0 0
          %953 = vmatprep.subr.bf16.mxu0 0
          %954 = vmatpush1.bf16.msra.mxu0 0
          %955 = vmatprep.subr.bf16.mxu0 0
          %956 = vmatpush1.bf16.msra.mxu0 0
          %957 = vmatprep.subr.bf16.mxu0 0
          %958 = vmatpush1.bf16.msra.mxu0 0
          %959 = vmatprep.mubr.bf16.mxu0 %v925
          %960 = vmatmul.mubr.bf16.gmra.mrb[0].mxu0 %v848
          %v961 = vpop.f32.mrb[0].mxu0
          %v962 = vadd.f32 %v839, %v961
          %v963 = vpop.f32.mrb[0].mxu0
          %v964 = vpop.f32.mrb[0].mxu0
          %v965 = vpop.f32.mrb[0].mxu0
          %966 = vdwg.mxu0
          %vm967 = vcmask 261120
          %968 = vst.msk [vmem:[#allocation2] sm:$0xff] %vm967, 0.0
          %v969 = vld [vmem:[%s3] sm:$0x1]
          %v970 = vld [vmem:[%s4] sm:$0x1]
          %v971 = vadd.f32 %v969, %v970
          %vm972 = vcmask 253952
          %973 = vst.msk [vmem:[#allocation2] sm:$0x1] %vm972, %v971
          %v974 = vld [vmem:[%s4 + $0x1] sm:$0xf]
          %v975 = vadd.f32 %v962, %v974
          %vm976 = vcmask 257024
          %977 = vst.msk [vmem:[#allocation2 + $0x1] sm:$0xf] %vm976, %v975
        $region100: #{tpu_custom_call.1} parent=95 // pred_fallthru
          _
        %v978 = vld [vmem:[#allocation2] sm:$0xff]
        %v979 = vlaneseq
        %v980 = vand.u32 %v979, 127
        %vm981 = vcmp.lt.s32.totalorder %v980, 5
        %v982 = vsel %vm981, 0.0, -1e+30
        %v983 = vld [vmem:[%s762] sm:$0x1]
        %v984 = vld [vmem:[%s765] sm:$0x1]
        %vm985 = vcmask 261120
        %v986 = vsel %vm985, %v978, 0.0
        %987 = vadd.xlane.f32.xlu0 %v986
        %v988 = vpop.xlane.xlu0 %987
        %v989 = vrcp.pop 32.0
        %v990 = vmul.f32 %v988, %v989
        %v991 = vsub.f32 %v978, %v990
        %v992 = vmul.f32 %v991, %v991
        %v993 = vsel %vm985, %v992, 0.0
        %994 = vadd.xlane.f32.xlu0 %v993
        %v995 = vpop.xlane.xlu0 %994
        %v996 = vmul.f32 %v995, %v989
        %v997 = vadd.f32 %v996, 1e-12
        %v998 = vrsqrt.pop %v997
        %v999 = vmul.f32 %v991, %v998
        %v1001 = vlaneseq
        %v1002 = vshrl.u32 %v1001, 7
        %v1003 = vsub.s32 0, %v1002
        %v1004 = vrot.slane %v983, %v1003
        %v1006 = vmul.f32 %v999, %v1004
        %v1008 = vlaneseq
        %v1009 = vshrl.u32 %v1008, 7
        %v1010 = vsub.s32 0, %v1009
        %v1011 = vrot.slane %v984, %v1010
        %v1013 = vadd.f32 %v1006, %v1011
        %v1014 = vpack.c.bf16 %v1013, %v1013
        %v1015 = vld [vmem:[%s770] sm:$0xf]
        %v1016 = vld [vmem:[%s770 + $0x4] sm:$0xf]
        %v1017 = vld [vmem:[%s770 + $0x8] sm:$0xf]
        %v1018 = vld [vmem:[%s770 + $0xc] sm:$0xf]
        %v1019 = vld [vmem:[%s773] sm:$0x1]
        %v1021 = vlaneseq
        %v1022 = vshrl.u32 %v1021, 7
        %v1023 = vsub.s32 0, %v1022
        %v1024 = vrot.slane %v1019, %v1023
        %v1030 = vunpack.c.l.b16 %v1015
        %v1031 = vunpack.c.l.b16 %v1016
        %v1032 = vunpack.c.l.b16 %v1017
        %v1033 = vunpack.c.l.b16 %v1018
        %v1034 = vpack.c.b16 %v1031, %v1030
        %v1035 = vpack.c.b16 %v1033, %v1032
        %v1039 = vsel %vm985, %v1014, 0
        %1041 = vmatprep.subr.bf16.mxu0 0
        %1042 = vmatpush1.bf16.msra.mxu0 %v1034
        %1043 = vmatprep.subr.bf16.mxu0 0
        %1044 = vmatpush1.bf16.msra.mxu0 %v1035
        %1045 = vmatprep.subr.bf16.mxu0 0
        %1046 = vmatpush1.bf16.msra.mxu0 0
        %1047 = vmatprep.subr.bf16.mxu0 0
        %1048 = vmatpush1.bf16.msra.mxu0 0
        %1049 = vmatprep.subr.bf16.mxu0 0
        %1050 = vmatpush1.bf16.msra.mxu0 0
        %1051 = vmatprep.subr.bf16.mxu0 0
        %1052 = vmatpush1.bf16.msra.mxu0 0
        %1053 = vmatprep.subr.bf16.mxu0 0
        %1054 = vmatpush1.bf16.msra.mxu0 0
        %1055 = vmatprep.subr.bf16.mxu0 0
        %1056 = vmatpush1.bf16.msra.mxu0 0
        %1057 = vmatprep.subr.bf16.mxu0 0
        %1058 = vmatpush1.bf16.msra.mxu0 0
        %1059 = vmatprep.subr.bf16.mxu0 0
        %1060 = vmatpush1.bf16.msra.mxu0 0
        %1061 = vmatprep.subr.bf16.mxu0 0
        %1062 = vmatpush1.bf16.msra.mxu0 0
        %1063 = vmatprep.subr.bf16.mxu0 0
        %1064 = vmatpush1.bf16.msra.mxu0 0
        %1065 = vmatprep.subr.bf16.mxu0 0
        %1066 = vmatpush1.bf16.msra.mxu0 0
        %1067 = vmatprep.subr.bf16.mxu0 0
        %1068 = vmatpush1.bf16.msra.mxu0 0
        %1069 = vmatprep.subr.bf16.mxu0 0
        %1070 = vmatpush1.bf16.msra.mxu0 0
        %1071 = vmatprep.subr.bf16.mxu0 0
        %1072 = vmatpush1.bf16.msra.mxu0 0
        %1073 = vmatprep.mubr.bf16.mxu0 0
        %1074 = vmatmul.mubr.bf16.gmra.mrb[0].mxu0 %v1039
        %v1075 = vpop.f32.mrb[0].mxu0
        %v1076 = vadd.f32 %v1024, %v1075
        %v1077 = vpop.f32.mrb[0].mxu0
        %v1078 = vpop.f32.mrb[0].mxu0
        %v1079 = vpop.f32.mrb[0].mxu0
        %1080 = vdwg.mxu0
        %v1081 = vmul.f32 %v1076, 0.35355338
        %v1082 = vpack.c.bf16 %v1081, %v1081
        %v1083 = vpack.c.bf16 %v1076, %v1076
        %1085 = vrot.lane.b32.xlu0 %v1083, 96
        %v1086 = vpop.permute.xlu0 %1085
        %vm1087 = vcmask 64512
        %v1089 = vsel %vm1087, %v1082, 0
        %v1092 = vsel %vm1087, %v1086, 0
        %1094 = vmatprep.subr.bf16.mxu0 0
        %1095 = vmatpush1.bf16.xpose.msra.mxu0 %v1092
        %1096 = vmatprep.subr.bf16.mxu0 0
        %1097 = vmatpush1.bf16.xpose.msra.mxu0 0
        %1098 = vmatprep.subr.bf16.mxu0 0
        %1099 = vmatpush1.bf16.xpose.msra.mxu0 0
        %1100 = vmatprep.subr.bf16.mxu0 0
        %1101 = vmatpush1.bf16.xpose.msra.mxu0 0
        %1102 = vmatprep.subr.bf16.mxu0 0
        %1103 = vmatpush1.bf16.xpose.msra.mxu0 0
        %1104 = vmatprep.subr.bf16.mxu0 0
        %1105 = vmatpush1.bf16.xpose.msra.mxu0 0
        %1106 = vmatprep.subr.bf16.mxu0 0
        %1107 = vmatpush1.bf16.xpose.msra.mxu0 0
        %1108 = vmatprep.subr.bf16.mxu0 0
        %1109 = vmatpush1.bf16.xpose.msra.mxu0 0
        %1110 = vmatprep.subr.bf16.mxu0 0
        %1111 = vmatpush1.bf16.xpose.msra.mxu0 0
        %1112 = vmatprep.subr.bf16.mxu0 0
        %1113 = vmatpush1.bf16.xpose.msra.mxu0 0
        %1114 = vmatprep.subr.bf16.mxu0 0
        %1115 = vmatpush1.bf16.xpose.msra.mxu0 0
        %1116 = vmatprep.subr.bf16.mxu0 0
        %1117 = vmatpush1.bf16.xpose.msra.mxu0 0
        %1118 = vmatprep.subr.bf16.mxu0 0
        %1119 = vmatpush1.bf16.xpose.msra.mxu0 0
        %1120 = vmatprep.subr.bf16.mxu0 0
        %1121 = vmatpush1.bf16.xpose.msra.mxu0 0
        %1122 = vmatprep.subr.bf16.mxu0 0
        %1123 = vmatpush1.bf16.xpose.msra.mxu0 0
        %1124 = vmatprep.subr.bf16.mxu0 0
        %1125 = vmatpush1.bf16.xpose.msra.mxu0 0
        %1126 = vmatprep.mubr.bf16.mxu0 0
        %1127 = vmatmul.mubr.bf16.gmra.mrb[0].mxu0 %v1089
        %v1128 = vpop.f32.mrb[0].mxu0
        %v1129 = vadd.f32 %v982, %v1128
        %v1130 = vpop.f32.mrb[0].mxu0
        %v1131 = vpop.f32.mrb[0].mxu0
        %v1132 = vpop.f32.mrb[0].mxu0
        %1133 = vdwg.mxu0
        %v1134 = vsel %vm1087, %v1129, -inf
        %1135 = vmax.xlane.f32.xlu0 %v1134
        %v1136 = vpop.xlane.xlu0 %1135
        %v1137 = vsub.f32 %v1129, %v1136
        %v1138 = vmul.f32 %v1137, 1.442695
        %v1139 = vpow.pop %v1138
        %v1140 = vsel %vm1087, %v1139, 0.0
        %1141 = vadd.xlane.f32.xlu0 %v1140
        %v1142 = vpop.xlane.xlu0 %1141
        %v1143 = vrcp.pop %v1142
        %v1144 = vmul.f32 %v1139, %v1143
        %v1145 = vpack.c.bf16 %v1144, %v1144
        %1146 = vrot.lane.b32.xlu0 %v1083, 64
        %v1147 = vpop.permute.xlu0 %1146
        %v1149 = vsel %vm1087, %v1145, 0
        %vm1151 = vcmask 1043456
        %v1153 = vsel %vm1151, %v1147, 0
        %1155 = vmatprep.subr.bf16.mxu0 0
        %1156 = vmatpush1.bf16.msra.mxu0 %v1153
        %1157 = vmatprep.subr.bf16.mxu0 0
        %1158 = vmatpush1.bf16.msra.mxu0 0
        %1159 = vmatprep.subr.bf16.mxu0 0
        %1160 = vmatpush1.bf16.msra.mxu0 0
        %1161 = vmatprep.subr.bf16.mxu0 0
        %1162 = vmatpush1.bf16.msra.mxu0 0
        %1163 = vmatprep.subr.bf16.mxu0 0
        %1164 = vmatpush1.bf16.msra.mxu0 0
        %1165 = vmatprep.subr.bf16.mxu0 0
        %1166 = vmatpush1.bf16.msra.mxu0 0
        %1167 = vmatprep.subr.bf16.mxu0 0
        %1168 = vmatpush1.bf16.msra.mxu0 0
        %1169 = vmatprep.subr.bf16.mxu0 0
        %1170 = vmatpush1.bf16.msra.mxu0 0
        %1171 = vmatprep.subr.bf16.mxu0 0
        %1172 = vmatpush1.bf16.msra.mxu0 0
        %1173 = vmatprep.subr.bf16.mxu0 0
        %1174 = vmatpush1.bf16.msra.mxu0 0
        %1175 = vmatprep.subr.bf16.mxu0 0
        %1176 = vmatpush1.bf16.msra.mxu0 0
        %1177 = vmatprep.subr.bf16.mxu0 0
        %1178 = vmatpush1.bf16.msra.mxu0 0
        %1179 = vmatprep.subr.bf16.mxu0 0
        %1180 = vmatpush1.bf16.msra.mxu0 0
        %1181 = vmatprep.subr.bf16.mxu0 0
        %1182 = vmatpush1.bf16.msra.mxu0 0
        %1183 = vmatprep.subr.bf16.mxu0 0
        %1184 = vmatpush1.bf16.msra.mxu0 0
        %1185 = vmatprep.subr.bf16.mxu0 0
        %1186 = vmatpush1.bf16.msra.mxu0 0
        %1187 = vmatprep.mubr.bf16.mxu0 0
        %1188 = vmatmul.mubr.bf16.gmra.mrb[0].mxu0 %v1149
        %v1189 = vpop.f32.mrb[0].mxu0
        %v1190 = vadd.f32 0.0, %v1189
        %v1191 = vpop.f32.mrb[0].mxu0
        %v1192 = vpop.f32.mrb[0].mxu0
        %v1193 = vpop.f32.mrb[0].mxu0
        %1194 = vdwg.mxu0
        %1195 = vst.msk [vmem:[#allocation3] sm:$0xff] %vm1087, %v1190
        %1197 = vrot.lane.b32.xlu0 %v1082, 120
        %v1198 = vpop.permute.xlu0 %1197
        %1199 = vrot.lane.b32.xlu0 %v1083, 88
        %v1200 = vpop.permute.xlu0 %1199
        %v1202 = vsel %vm1087, %v1198, 0
        %v1205 = vsel %vm1087, %v1200, 0
        %1207 = vmatprep.subr.bf16.mxu0 0
        %1208 = vmatpush1.bf16.xpose.msra.mxu0 %v1205
        %1209 = vmatprep.subr.bf16.mxu0 0
        %1210 = vmatpush1.bf16.xpose.msra.mxu0 0
        %1211 = vmatprep.subr.bf16.mxu0 0
        %1212 = vmatpush1.bf16.xpose.msra.mxu0 0
        %1213 = vmatprep.subr.bf16.mxu0 0
        %1214 = vmatpush1.bf16.xpose.msra.mxu0 0
        %1215 = vmatprep.subr.bf16.mxu0 0
        %1216 = vmatpush1.bf16.xpose.msra.mxu0 0
        %1217 = vmatprep.subr.bf16.mxu0 0
        %1218 = vmatpush1.bf16.xpose.msra.mxu0 0
        %1219 = vmatprep.subr.bf16.mxu0 0
        %1220 = vmatpush1.bf16.xpose.msra.mxu0 0
        %1221 = vmatprep.subr.bf16.mxu0 0
        %1222 = vmatpush1.bf16.xpose.msra.mxu0 0
        %1223 = vmatprep.subr.bf16.mxu0 0
        %1224 = vmatpush1.bf16.xpose.msra.mxu0 0
        %1225 = vmatprep.subr.bf16.mxu0 0
        %1226 = vmatpush1.bf16.xpose.msra.mxu0 0
        %1227 = vmatprep.subr.bf16.mxu0 0
        %1228 = vmatpush1.bf16.xpose.msra.mxu0 0
        %1229 = vmatprep.subr.bf16.mxu0 0
        %1230 = vmatpush1.bf16.xpose.msra.mxu0 0
        %1231 = vmatprep.subr.bf16.mxu0 0
        %1232 = vmatpush1.bf16.xpose.msra.mxu0 0
        %1233 = vmatprep.subr.bf16.mxu0 0
        %1234 = vmatpush1.bf16.xpose.msra.mxu0 0
        %1235 = vmatprep.subr.bf16.mxu0 0
        %1236 = vmatpush1.bf16.xpose.msra.mxu0 0
        %1237 = vmatprep.subr.bf16.mxu0 0
        %1238 = vmatpush1.bf16.xpose.msra.mxu0 0
        %1239 = vmatprep.mubr.bf16.mxu0 0
        %1240 = vmatmul.mubr.bf16.gmra.mrb[0].mxu0 %v1202
        %v1241 = vpop.f32.mrb[0].mxu0
        %v1242 = vadd.f32 %v982, %v1241
        %v1243 = vpop.f32.mrb[0].mxu0
        %v1244 = vpop.f32.mrb[0].mxu0
        %v1245 = vpop.f32.mrb[0].mxu0
        %1246 = vdwg.mxu0
        %v1247 = vsel %vm1087, %v1242, -inf
        %1248 = vmax.xlane.f32.xlu0 %v1247
        %v1249 = vpop.xlane.xlu0 %1248
        %v1250 = vsub.f32 %v1242, %v1249
        %v1251 = vmul.f32 %v1250, 1.442695
        %v1252 = vpow.pop %v1251
        %v1253 = vsel %vm1087, %v1252, 0.0
        %1254 = vadd.xlane.f32.xlu0 %v1253
        %v1255 = vpop.xlane.xlu0 %1254
        %v1256 = vrcp.pop %v1255
        %v1257 = vmul.f32 %v1252, %v1256
        %v1258 = vpack.c.bf16 %v1257, %v1257
        %1259 = vrot.lane.b32.xlu0 %v1083, 56
        %v1260 = vpop.permute.xlu0 %1259
        %v1262 = vsel %vm1087, %v1258, 0
        %v1265 = vsel %vm1151, %v1260, 0
        %1267 = vmatprep.subr.bf16.mxu0 0
        %1268 = vmatpush1.bf16.msra.mxu0 %v1265
        %1269 = vmatprep.subr.bf16.mxu0 0
        %1270 = vmatpush1.bf16.msra.mxu0 0
        %1271 = vmatprep.subr.bf16.mxu0 0
        %1272 = vmatpush1.bf16.msra.mxu0 0
        %1273 = vmatprep.subr.bf16.mxu0 0
        %1274 = vmatpush1.bf16.msra.mxu0 0
        %1275 = vmatprep.subr.bf16.mxu0 0
        %1276 = vmatpush1.bf16.msra.mxu0 0
        %1277 = vmatprep.subr.bf16.mxu0 0
        %1278 = vmatpush1.bf16.msra.mxu0 0
        %1279 = vmatprep.subr.bf16.mxu0 0
        %1280 = vmatpush1.bf16.msra.mxu0 0
        %1281 = vmatprep.subr.bf16.mxu0 0
        %1282 = vmatpush1.bf16.msra.mxu0 0
        %1283 = vmatprep.subr.bf16.mxu0 0
        %1284 = vmatpush1.bf16.msra.mxu0 0
        %1285 = vmatprep.subr.bf16.mxu0 0
        %1286 = vmatpush1.bf16.msra.mxu0 0
        %1287 = vmatprep.subr.bf16.mxu0 0
        %1288 = vmatpush1.bf16.msra.mxu0 0
        %1289 = vmatprep.subr.bf16.mxu0 0
        %1290 = vmatpush1.bf16.msra.mxu0 0
        %1291 = vmatprep.subr.bf16.mxu0 0
        %1292 = vmatpush1.bf16.msra.mxu0 0
        %1293 = vmatprep.subr.bf16.mxu0 0
        %1294 = vmatpush1.bf16.msra.mxu0 0
        %1295 = vmatprep.subr.bf16.mxu0 0
        %1296 = vmatpush1.bf16.msra.mxu0 0
        %1297 = vmatprep.subr.bf16.mxu0 0
        %1298 = vmatpush1.bf16.msra.mxu0 0
        %1299 = vmatprep.mubr.bf16.mxu0 0
        %1300 = vmatmul.mubr.bf16.gmra.mrb[0].mxu0 %v1262
        %v1301 = vpop.f32.mrb[0].mxu0
        %v1302 = vadd.f32 0.0, %v1301
        %v1303 = vpop.f32.mrb[0].mxu0
        %v1304 = vpop.f32.mrb[0].mxu0
        %v1305 = vpop.f32.mrb[0].mxu0
        %1306 = vdwg.mxu0
        %1308 = vrot.lane.b32.xlu0 %v1302, 8
        %v1309 = vpop.permute.xlu0 %1308
        %vm1311 = vcmask 130112
        %1312 = vst.msk [vmem:[#allocation3] sm:$0xff] %vm1311, %v1309
        %1313 = vrot.lane.b32.xlu0 %v1082, 112
        %v1314 = vpop.permute.xlu0 %1313
        %1315 = vrot.lane.b32.xlu0 %v1083, 80
        %v1316 = vpop.permute.xlu0 %1315
        %v1318 = vsel %vm1087, %v1314, 0
        %v1321 = vsel %vm1087, %v1316, 0
        %1323 = vmatprep.subr.bf16.mxu0 0
        %1324 = vmatpush1.bf16.xpose.msra.mxu0 %v1321
        %1325 = vmatprep.subr.bf16.mxu0 0
        %1326 = vmatpush1.bf16.xpose.msra.mxu0 0
        %1327 = vmatprep.subr.bf16.mxu0 0
        %1328 = vmatpush1.bf16.xpose.msra.mxu0 0
        %1329 = vmatprep.subr.bf16.mxu0 0
        %1330 = vmatpush1.bf16.xpose.msra.mxu0 0
        %1331 = vmatprep.subr.bf16.mxu0 0
        %1332 = vmatpush1.bf16.xpose.msra.mxu0 0
        %1333 = vmatprep.subr.bf16.mxu0 0
        %1334 = vmatpush1.bf16.xpose.msra.mxu0 0
        %1335 = vmatprep.subr.bf16.mxu0 0
        %1336 = vmatpush1.bf16.xpose.msra.mxu0 0
        %1337 = vmatprep.subr.bf16.mxu0 0
        %1338 = vmatpush1.bf16.xpose.msra.mxu0 0
        %1339 = vmatprep.subr.bf16.mxu0 0
        %1340 = vmatpush1.bf16.xpose.msra.mxu0 0
        %1341 = vmatprep.subr.bf16.mxu0 0
        %1342 = vmatpush1.bf16.xpose.msra.mxu0 0
        %1343 = vmatprep.subr.bf16.mxu0 0
        %1344 = vmatpush1.bf16.xpose.msra.mxu0 0
        %1345 = vmatprep.subr.bf16.mxu0 0
        %1346 = vmatpush1.bf16.xpose.msra.mxu0 0
        %1347 = vmatprep.subr.bf16.mxu0 0
        %1348 = vmatpush1.bf16.xpose.msra.mxu0 0
        %1349 = vmatprep.subr.bf16.mxu0 0
        %1350 = vmatpush1.bf16.xpose.msra.mxu0 0
        %1351 = vmatprep.subr.bf16.mxu0 0
        %1352 = vmatpush1.bf16.xpose.msra.mxu0 0
        %1353 = vmatprep.subr.bf16.mxu0 0
        %1354 = vmatpush1.bf16.xpose.msra.mxu0 0
        %1355 = vmatprep.mubr.bf16.mxu0 0
        %1356 = vmatmul.mubr.bf16.gmra.mrb[0].mxu0 %v1318
        %v1357 = vpop.f32.mrb[0].mxu0
        %v1358 = vadd.f32 %v982, %v1357
        %v1359 = vpop.f32.mrb[0].mxu0
        %v1360 = vpop.f32.mrb[0].mxu0
        %v1361 = vpop.f32.mrb[0].mxu0
        %1362 = vdwg.mxu0
        %v1363 = vsel %vm1087, %v1358, -inf
        %1364 = vmax.xlane.f32.xlu0 %v1363
        %v1365 = vpop.xlane.xlu0 %1364
        %v1366 = vsub.f32 %v1358, %v1365
        %v1367 = vmul.f32 %v1366, 1.442695
        %v1368 = vpow.pop %v1367
        %v1369 = vsel %vm1087, %v1368, 0.0
        %1370 = vadd.xlane.f32.xlu0 %v1369
        %v1371 = vpop.xlane.xlu0 %1370
        %v1372 = vrcp.pop %v1371
        %v1373 = vmul.f32 %v1368, %v1372
        %v1374 = vpack.c.bf16 %v1373, %v1373
        %1375 = vrot.lane.b32.xlu0 %v1083, 48
        %v1376 = vpop.permute.xlu0 %1375
        %v1378 = vsel %vm1087, %v1374, 0
        %v1381 = vsel %vm1151, %v1376, 0
        %1383 = vmatprep.subr.bf16.mxu0 0
        %1384 = vmatpush1.bf16.msra.mxu0 %v1381
        %1385 = vmatprep.subr.bf16.mxu0 0
        %1386 = vmatpush1.bf16.msra.mxu0 0
        %1387 = vmatprep.subr.bf16.mxu0 0
        %1388 = vmatpush1.bf16.msra.mxu0 0
        %1389 = vmatprep.subr.bf16.mxu0 0
        %1390 = vmatpush1.bf16.msra.mxu0 0
        %1391 = vmatprep.subr.bf16.mxu0 0
        %1392 = vmatpush1.bf16.msra.mxu0 0
        %1393 = vmatprep.subr.bf16.mxu0 0
        %1394 = vmatpush1.bf16.msra.mxu0 0
        %1395 = vmatprep.subr.bf16.mxu0 0
        %1396 = vmatpush1.bf16.msra.mxu0 0
        %1397 = vmatprep.subr.bf16.mxu0 0
        %1398 = vmatpush1.bf16.msra.mxu0 0
        %1399 = vmatprep.subr.bf16.mxu0 0
        %1400 = vmatpush1.bf16.msra.mxu0 0
        %1401 = vmatprep.subr.bf16.mxu0 0
        %1402 = vmatpush1.bf16.msra.mxu0 0
        %1403 = vmatprep.subr.bf16.mxu0 0
        %1404 = vmatpush1.bf16.msra.mxu0 0
        %1405 = vmatprep.subr.bf16.mxu0 0
        %1406 = vmatpush1.bf16.msra.mxu0 0
        %1407 = vmatprep.subr.bf16.mxu0 0
        %1408 = vmatpush1.bf16.msra.mxu0 0
        %1409 = vmatprep.subr.bf16.mxu0 0
        %1410 = vmatpush1.bf16.msra.mxu0 0
        %1411 = vmatprep.subr.bf16.mxu0 0
        %1412 = vmatpush1.bf16.msra.mxu0 0
        %1413 = vmatprep.subr.bf16.mxu0 0
        %1414 = vmatpush1.bf16.msra.mxu0 0
        %1415 = vmatprep.mubr.bf16.mxu0 0
        %1416 = vmatmul.mubr.bf16.gmra.mrb[0].mxu0 %v1378
        %v1417 = vpop.f32.mrb[0].mxu0
        %v1418 = vadd.f32 0.0, %v1417
        %v1419 = vpop.f32.mrb[0].mxu0
        %v1420 = vpop.f32.mrb[0].mxu0
        %v1421 = vpop.f32.mrb[0].mxu0
        %1422 = vdwg.mxu0
        %1424 = vrot.lane.b32.xlu0 %v1418, 16
        %v1425 = vpop.permute.xlu0 %1424
        %vm1427 = vcmask 195712
        %1428 = vst.msk [vmem:[#allocation3] sm:$0xff] %vm1427, %v1425
        %1429 = vrot.lane.b32.xlu0 %v1082, 104
        %v1430 = vpop.permute.xlu0 %1429
        %1431 = vrot.lane.b32.xlu0 %v1083, 72
        %v1432 = vpop.permute.xlu0 %1431
        %v1434 = vsel %vm1087, %v1430, 0
        %v1437 = vsel %vm1087, %v1432, 0
        %1439 = vmatprep.subr.bf16.mxu0 0
        %1440 = vmatpush1.bf16.xpose.msra.mxu0 %v1437
        %1441 = vmatprep.subr.bf16.mxu0 0
        %1442 = vmatpush1.bf16.xpose.msra.mxu0 0
        %1443 = vmatprep.subr.bf16.mxu0 0
        %1444 = vmatpush1.bf16.xpose.msra.mxu0 0
        %1445 = vmatprep.subr.bf16.mxu0 0
        %1446 = vmatpush1.bf16.xpose.msra.mxu0 0
        %1447 = vmatprep.subr.bf16.mxu0 0
        %1448 = vmatpush1.bf16.xpose.msra.mxu0 0
        %1449 = vmatprep.subr.bf16.mxu0 0
        %1450 = vmatpush1.bf16.xpose.msra.mxu0 0
        %1451 = vmatprep.subr.bf16.mxu0 0
        %1452 = vmatpush1.bf16.xpose.msra.mxu0 0
        %1453 = vmatprep.subr.bf16.mxu0 0
        %1454 = vmatpush1.bf16.xpose.msra.mxu0 0
        %1455 = vmatprep.subr.bf16.mxu0 0
        %1456 = vmatpush1.bf16.xpose.msra.mxu0 0
        %1457 = vmatprep.subr.bf16.mxu0 0
        %1458 = vmatpush1.bf16.xpose.msra.mxu0 0
        %1459 = vmatprep.subr.bf16.mxu0 0
        %1460 = vmatpush1.bf16.xpose.msra.mxu0 0
        %1461 = vmatprep.subr.bf16.mxu0 0
        %1462 = vmatpush1.bf16.xpose.msra.mxu0 0
        %1463 = vmatprep.subr.bf16.mxu0 0
        %1464 = vmatpush1.bf16.xpose.msra.mxu0 0
        %1465 = vmatprep.subr.bf16.mxu0 0
        %1466 = vmatpush1.bf16.xpose.msra.mxu0 0
        %1467 = vmatprep.subr.bf16.mxu0 0
        %1468 = vmatpush1.bf16.xpose.msra.mxu0 0
        %1469 = vmatprep.subr.bf16.mxu0 0
        %1470 = vmatpush1.bf16.xpose.msra.mxu0 0
        %1471 = vmatprep.mubr.bf16.mxu0 0
        %1472 = vmatmul.mubr.bf16.gmra.mrb[0].mxu0 %v1434
        %v1473 = vpop.f32.mrb[0].mxu0
        %v1474 = vadd.f32 %v982, %v1473
        %v1475 = vpop.f32.mrb[0].mxu0
        %v1476 = vpop.f32.mrb[0].mxu0
        %v1477 = vpop.f32.mrb[0].mxu0
        %1478 = vdwg.mxu0
        %v1479 = vsel %vm1087, %v1474, -inf
        %1480 = vmax.xlane.f32.xlu0 %v1479
        %v1481 = vpop.xlane.xlu0 %1480
        %v1482 = vsub.f32 %v1474, %v1481
        %v1483 = vmul.f32 %v1482, 1.442695
        %v1484 = vpow.pop %v1483
        %v1485 = vsel %vm1087, %v1484, 0.0
        %1486 = vadd.xlane.f32.xlu0 %v1485
        %v1487 = vpop.xlane.xlu0 %1486
        %v1488 = vrcp.pop %v1487
        %v1489 = vmul.f32 %v1484, %v1488
        %v1490 = vpack.c.bf16 %v1489, %v1489
        %1491 = vrot.lane.b32.xlu0 %v1083, 40
        %v1492 = vpop.permute.xlu0 %1491
        %v1494 = vsel %vm1087, %v1490, 0
        %v1497 = vsel %vm1151, %v1492, 0
        %1499 = vmatprep.subr.bf16.mxu0 0
        %1500 = vmatpush1.bf16.msra.mxu0 %v1497
        %1501 = vmatprep.subr.bf16.mxu0 0
        %1502 = vmatpush1.bf16.msra.mxu0 0
        %1503 = vmatprep.subr.bf16.mxu0 0
        %1504 = vmatpush1.bf16.msra.mxu0 0
        %1505 = vmatprep.subr.bf16.mxu0 0
        %1506 = vmatpush1.bf16.msra.mxu0 0
        %1507 = vmatprep.subr.bf16.mxu0 0
        %1508 = vmatpush1.bf16.msra.mxu0 0
        %1509 = vmatprep.subr.bf16.mxu0 0
        %1510 = vmatpush1.bf16.msra.mxu0 0
        %1511 = vmatprep.subr.bf16.mxu0 0
        %1512 = vmatpush1.bf16.msra.mxu0 0
        %1513 = vmatprep.subr.bf16.mxu0 0
        %1514 = vmatpush1.bf16.msra.mxu0 0
        %1515 = vmatprep.subr.bf16.mxu0 0
        %1516 = vmatpush1.bf16.msra.mxu0 0
        %1517 = vmatprep.subr.bf16.mxu0 0
        %1518 = vmatpush1.bf16.msra.mxu0 0
        %1519 = vmatprep.subr.bf16.mxu0 0
        %1520 = vmatpush1.bf16.msra.mxu0 0
        %1521 = vmatprep.subr.bf16.mxu0 0
        %1522 = vmatpush1.bf16.msra.mxu0 0
        %1523 = vmatprep.subr.bf16.mxu0 0
        %1524 = vmatpush1.bf16.msra.mxu0 0
        %1525 = vmatprep.subr.bf16.mxu0 0
        %1526 = vmatpush1.bf16.msra.mxu0 0
        %1527 = vmatprep.subr.bf16.mxu0 0
        %1528 = vmatpush1.bf16.msra.mxu0 0
        %1529 = vmatprep.subr.bf16.mxu0 0
        %1530 = vmatpush1.bf16.msra.mxu0 0
        %1531 = vmatprep.mubr.bf16.mxu0 0
        %1532 = vmatmul.mubr.bf16.gmra.mrb[0].mxu0 %v1494
        %v1533 = vpop.f32.mrb[0].mxu0
        %v1534 = vadd.f32 0.0, %v1533
        %v1535 = vpop.f32.mrb[0].mxu0
        %v1536 = vpop.f32.mrb[0].mxu0
        %v1537 = vpop.f32.mrb[0].mxu0
        %1538 = vdwg.mxu0
        %1540 = vrot.lane.b32.xlu0 %v1534, 24
        %v1541 = vpop.permute.xlu0 %1540
        %vm1543 = vcmask 261312
        %1544 = vst.msk [vmem:[#allocation3] sm:$0xff] %vm1543, %v1541
        %v1545 = vld [vmem:[#allocation3] sm:$0xff]
        %v1546 = vpack.c.bf16 %v1545, %v1545
        %v1547 = vld [vmem:[%s778] sm:$0xf]
        %v1548 = vld [vmem:[%s778 + $0x4] sm:$0xf]
        %v1549 = vld [vmem:[%s778 + $0x8] sm:$0xf]
        %v1550 = vld [vmem:[%s778 + $0xc] sm:$0xf]
        %v1555 = vunpack.c.l.b16 %v1547
        %v1556 = vunpack.c.l.b16 %v1548
        %v1557 = vunpack.c.l.b16 %v1549
        %v1558 = vunpack.c.l.b16 %v1550
        %v1559 = vpack.c.b16 %v1556, %v1555
        %v1560 = vpack.c.b16 %v1558, %v1557
        %v1564 = vsel %vm985, %v1546, 0
        %1566 = vmatprep.subr.bf16.mxu0 0
        %1567 = vmatpush1.bf16.msra.mxu0 %v1559
        %1568 = vmatprep.subr.bf16.mxu0 0
        %1569 = vmatpush1.bf16.msra.mxu0 %v1560
        %1570 = vmatprep.subr.bf16.mxu0 0
        %1571 = vmatpush1.bf16.msra.mxu0 0
        %1572 = vmatprep.subr.bf16.mxu0 0
        %1573 = vmatpush1.bf16.msra.mxu0 0
        %1574 = vmatprep.subr.bf16.mxu0 0
        %1575 = vmatpush1.bf16.msra.mxu0 0
        %1576 = vmatprep.subr.bf16.mxu0 0
        %1577 = vmatpush1.bf16.msra.mxu0 0
        %1578 = vmatprep.subr.bf16.mxu0 0
        %1579 = vmatpush1.bf16.msra.mxu0 0
        %1580 = vmatprep.subr.bf16.mxu0 0
        %1581 = vmatpush1.bf16.msra.mxu0 0
        %1582 = vmatprep.subr.bf16.mxu0 0
        %1583 = vmatpush1.bf16.msra.mxu0 0
        %1584 = vmatprep.subr.bf16.mxu0 0
        %1585 = vmatpush1.bf16.msra.mxu0 0
        %1586 = vmatprep.subr.bf16.mxu0 0
        %1587 = vmatpush1.bf16.msra.mxu0 0
        %1588 = vmatprep.subr.bf16.mxu0 0
        %1589 = vmatpush1.bf16.msra.mxu0 0
        %1590 = vmatprep.subr.bf16.mxu0 0
        %1591 = vmatpush1.bf16.msra.mxu0 0
        %1592 = vmatprep.subr.bf16.mxu0 0
        %1593 = vmatpush1.bf16.msra.mxu0 0
        %1594 = vmatprep.subr.bf16.mxu0 0
        %1595 = vmatpush1.bf16.msra.mxu0 0
        %1596 = vmatprep.subr.bf16.mxu0 0
        %1597 = vmatpush1.bf16.msra.mxu0 0
        %1598 = vmatprep.mubr.bf16.mxu0 0
        %1599 = vmatmul.mubr.bf16.gmra.mrb[0].mxu0 %v1564
        %v1600 = vpop.f32.mrb[0].mxu0
        %v1601 = vadd.f32 0.0, %v1600
        %v1602 = vpop.f32.mrb[0].mxu0
        %v1603 = vpop.f32.mrb[0].mxu0
        %v1604 = vpop.f32.mrb[0].mxu0
        %1605 = vdwg.mxu0
        %v1606 = vadd.f32 %v978, %v1601
        %v1607 = vld [vmem:[%s781] sm:$0x1]
        %v1609 = vlaneseq
        %v1610 = vshrl.u32 %v1609, 7
        %v1611 = vsub.s32 0, %v1610
        %v1612 = vrot.slane %v1607, %v1611
        %v1614 = vadd.f32 %v1606, %v1612
        %v1615 = vld [vmem:[%s784] sm:$0x1]
        %v1616 = vld [vmem:[%s787] sm:$0x1]
        %v1617 = vsel %vm985, %v1614, 0.0
        %1618 = vadd.xlane.f32.xlu0 %v1617
        %v1619 = vpop.xlane.xlu0 %1618
        %v1620 = vmul.f32 %v1619, %v989
        %v1621 = vsub.f32 %v1614, %v1620
        %v1622 = vmul.f32 %v1621, %v1621
        %v1623 = vsel %vm985, %v1622, 0.0
        %1624 = vadd.xlane.f32.xlu0 %v1623
        %v1625 = vpop.xlane.xlu0 %1624
        %v1626 = vmul.f32 %v1625, %v989
        %v1627 = vadd.f32 %v1626, 1e-12
        %v1628 = vrsqrt.pop %v1627
        %v1629 = vmul.f32 %v1621, %v1628
        %v1631 = vlaneseq
        %v1632 = vshrl.u32 %v1631, 7
        %v1633 = vsub.s32 0, %v1632
        %v1634 = vrot.slane %v1615, %v1633
        %v1636 = vmul.f32 %v1629, %v1634
        %v1638 = vlaneseq
        %v1639 = vshrl.u32 %v1638, 7
        %v1640 = vsub.s32 0, %v1639
        %v1641 = vrot.slane %v1616, %v1640
        %v1643 = vadd.f32 %v1636, %v1641
        %v1644 = vpack.c.bf16 %v1643, %v1643
        %v1645 = vld [vmem:[%s792] sm:$0xf]
        %v1646 = vld [vmem:[%s792 + $0x4] sm:$0xf]
        %v1647 = vld [vmem:[%s792 + $0x8] sm:$0xf]
        %v1648 = vld [vmem:[%s792 + $0xc] sm:$0xf]
        %v1649 = vld [vmem:[%s795] sm:$0x1]
        %v1651 = vlaneseq
        %v1652 = vshrl.u32 %v1651, 7
        %v1653 = vsub.s32 0, %v1652
        %v1654 = vrot.slane %v1649, %v1653
        %v1660 = vunpack.c.l.b16 %v1645
        %v1661 = vunpack.c.l.b16 %v1646
        %v1662 = vunpack.c.l.b16 %v1647
        %v1663 = vunpack.c.l.b16 %v1648
        %v1664 = vpack.c.b16 %v1661, %v1660
        %v1665 = vpack.c.b16 %v1663, %v1662
        %v1669 = vsel %vm985, %v1644, 0
        %1671 = vmatprep.subr.bf16.mxu0 0
        %1672 = vmatpush1.bf16.msra.mxu0 %v1664
        %1673 = vmatprep.subr.bf16.mxu0 0
        %1674 = vmatpush1.bf16.msra.mxu0 %v1665
        %1675 = vmatprep.subr.bf16.mxu0 0
        %1676 = vmatpush1.bf16.msra.mxu0 0
        %1677 = vmatprep.subr.bf16.mxu0 0
        %1678 = vmatpush1.bf16.msra.mxu0 0
        %1679 = vmatprep.subr.bf16.mxu0 0
        %1680 = vmatpush1.bf16.msra.mxu0 0
        %1681 = vmatprep.subr.bf16.mxu0 0
        %1682 = vmatpush1.bf16.msra.mxu0 0
        %1683 = vmatprep.subr.bf16.mxu0 0
        %1684 = vmatpush1.bf16.msra.mxu0 0
        %1685 = vmatprep.subr.bf16.mxu0 0
        %1686 = vmatpush1.bf16.msra.mxu0 0
        %1687 = vmatprep.subr.bf16.mxu0 0
        %1688 = vmatpush1.bf16.msra.mxu0 0
        %1689 = vmatprep.subr.bf16.mxu0 0
        %1690 = vmatpush1.bf16.msra.mxu0 0
        %1691 = vmatprep.subr.bf16.mxu0 0
        %1692 = vmatpush1.bf16.msra.mxu0 0
        %1693 = vmatprep.subr.bf16.mxu0 0
        %1694 = vmatpush1.bf16.msra.mxu0 0
        %1695 = vmatprep.subr.bf16.mxu0 0
        %1696 = vmatpush1.bf16.msra.mxu0 0
        %1697 = vmatprep.subr.bf16.mxu0 0
        %1698 = vmatpush1.bf16.msra.mxu0 0
        %1699 = vmatprep.subr.bf16.mxu0 0
        %1700 = vmatpush1.bf16.msra.mxu0 0
        %1701 = vmatprep.subr.bf16.mxu0 0
        %1702 = vmatpush1.bf16.msra.mxu0 0
        %1703 = vmatprep.mubr.bf16.mxu0 0
        %1704 = vmatmul.mubr.bf16.gmra.mrb[0].mxu0 %v1669
        %v1705 = vpop.f32.mrb[0].mxu0
        %v1706 = vadd.f32 %v1654, %v1705
        %v1707 = vpop.f32.mrb[0].mxu0
        %v1708 = vpop.f32.mrb[0].mxu0
        %v1709 = vpop.f32.mrb[0].mxu0
        %1710 = vdwg.mxu0
        %v1711 = vmul.f32 %v1706, %v1706
        %v1712 = vmul.f32 %v1706, %v1711
        %v1713 = vmul.f32 %v1712, 0.044715
        %v1714 = vadd.f32 %v1706, %v1713
        %v1715 = vmul.f32 %v1714, 0.7978846
        %v1716 = vtanh.pop %v1715
        %v1717 = vadd.f32 %v1716, 1.0
        %v1718 = vmul.f32 %v1717, 0.5
        %v1719 = vmul.f32 %v1706, %v1718
        %v1720 = vpack.c.bf16 %v1719, %v1719
        %v1721 = vld [vmem:[%s800] sm:$0xf]
        %v1722 = vld [vmem:[%s800 + $0x4] sm:$0xf]
        %v1723 = vld [vmem:[%s800 + $0x8] sm:$0xf]
        %v1724 = vld [vmem:[%s800 + $0xc] sm:$0xf]
        %v1725 = vld [vmem:[%s800 + $0x10] sm:$0xf]
        %v1726 = vld [vmem:[%s800 + $0x14] sm:$0xf]
        %v1727 = vld [vmem:[%s800 + $0x18] sm:$0xf]
        %v1728 = vld [vmem:[%s800 + $0x1c] sm:$0xf]
        %v1737 = vunpack.c.l.b16 %v1721
        %v1738 = vunpack.c.l.b16 %v1722
        %v1739 = vunpack.c.l.b16 %v1723
        %v1740 = vunpack.c.l.b16 %v1724
        %v1741 = vunpack.c.l.b16 %v1725
        %v1742 = vunpack.c.l.b16 %v1726
        %v1743 = vunpack.c.l.b16 %v1727
        %v1744 = vunpack.c.l.b16 %v1728
        %v1745 = vpack.c.b16 %v1738, %v1737
        %v1746 = vpack.c.b16 %v1740, %v1739
        %v1747 = vpack.c.b16 %v1742, %v1741
        %v1748 = vpack.c.b16 %v1744, %v1743
        %vm1753 = vcmask 523264
        %v1755 = vsel %vm1753, %v1720, 0
        %1757 = vmatprep.subr.bf16.mxu0 0
        %1758 = vmatpush1.bf16.msra.mxu0 %v1745
        %1759 = vmatprep.subr.bf16.mxu0 0
        %1760 = vmatpush1.bf16.msra.mxu0 %v1746
        %1761 = vmatprep.subr.bf16.mxu0 0
        %1762 = vmatpush1.bf16.msra.mxu0 %v1747
        %1763 = vmatprep.subr.bf16.mxu0 0
        %1764 = vmatpush1.bf16.msra.mxu0 %v1748
        %1765 = vmatprep.subr.bf16.mxu0 0
        %1766 = vmatpush1.bf16.msra.mxu0 0
        %1767 = vmatprep.subr.bf16.mxu0 0
        %1768 = vmatpush1.bf16.msra.mxu0 0
        %1769 = vmatprep.subr.bf16.mxu0 0
        %1770 = vmatpush1.bf16.msra.mxu0 0
        %1771 = vmatprep.subr.bf16.mxu0 0
        %1772 = vmatpush1.bf16.msra.mxu0 0
        %1773 = vmatprep.subr.bf16.mxu0 0
        %1774 = vmatpush1.bf16.msra.mxu0 0
        %1775 = vmatprep.subr.bf16.mxu0 0
        %1776 = vmatpush1.bf16.msra.mxu0 0
        %1777 = vmatprep.subr.bf16.mxu0 0
        %1778 = vmatpush1.bf16.msra.mxu0 0
        %1779 = vmatprep.subr.bf16.mxu0 0
        %1780 = vmatpush1.bf16.msra.mxu0 0
        %1781 = vmatprep.subr.bf16.mxu0 0
        %1782 = vmatpush1.bf16.msra.mxu0 0
        %1783 = vmatprep.subr.bf16.mxu0 0
        %1784 = vmatpush1.bf16.msra.mxu0 0
        %1785 = vmatprep.subr.bf16.mxu0 0
        %1786 = vmatpush1.bf16.msra.mxu0 0
        %1787 = vmatprep.subr.bf16.mxu0 0
        %1788 = vmatpush1.bf16.msra.mxu0 0
        %1789 = vmatprep.mubr.bf16.mxu0 0
        %1790 = vmatmul.mubr.bf16.gmra.mrb[0].mxu0 %v1755
        %v1791 = vpop.f32.mrb[0].mxu0
        %v1792 = vadd.f32 0.0, %v1791
        %v1793 = vpop.f32.mrb[0].mxu0
        %v1794 = vpop.f32.mrb[0].mxu0
        %v1795 = vpop.f32.mrb[0].mxu0
        %1796 = vdwg.mxu0
        %v1797 = vadd.f32 %v1614, %v1792
        %v1798 = vld [vmem:[%s803] sm:$0x1]
        %v1800 = vlaneseq
        %v1801 = vshrl.u32 %v1800, 7
        %v1802 = vsub.s32 0, %v1801
        %v1803 = vrot.slane %v1798, %v1802
        %v1805 = vadd.f32 %v1797, %v1803
        %1806 = vst.msk [vmem:[#allocation2] sm:$0xff] %vm985, %v1805
        %p1807 = scmp.eq.s32.totalorder %s38, 1
        // Predicated region
        $region101: #{tpu_custom_call.1} parent=95 // pred_check
          %p1808 = pneg %p1807
        $region102: #{tpu_custom_call.1} parent=95 // pred_check_branch
          %1810 = sbr.rel (%p1808) target = $region104
        $region103: #{tpu_custom_call.1} parent=95 // pred_region
          %v1811 = vld [vmem:[%s17] sm:$0x1]
          %v1812 = vld [vmem:[%s18] sm:$0x1]
          %vm1813 = vcmask 253952
          %v1814 = vsel %vm1813, %v1805, 0.0
          %1815 = vadd.xlane.f32.xlu0 %v1814
          %v1816 = vpop.xlane.xlu0 %1815
          %v1817 = vmul.f32 %v1816, %v989
          %v1818 = vsub.f32 %v1805, %v1817
          %v1819 = vmul.f32 %v1818, %v1818
          %v1820 = vsel %vm1813, %v1819, 0.0
          %1821 = vadd.xlane.f32.xlu0 %v1820
          %v1822 = vpop.xlane.xlu0 %1821
          %v1823 = vmul.f32 %v1822, %v989
          %v1824 = vadd.f32 %v1823, 1e-12
          %v1825 = vrsqrt.pop %v1824
          %v1826 = vmul.f32 %v1818, %v1825
          %v1827 = vmul.f32 %v1826, %v1811
          %v1828 = vadd.f32 %v1827, %v1812
          %1829 = vst.msk [vmem:[%s754] sm:$0x1] %vm1813, %v1828
        $region104: #{tpu_custom_call.1} parent=95 // pred_fallthru
          _
        %s1830 = sand.u32 %s517, 1
        %s1831 = scalar_lea.sflag [#allocation5], %s1830
        %s1832 = sand.u32 %s517, 1
        %s1833 = scalar_lea.vmem [#allocation4], %s1832
        // Predicated region
        $region105: #{tpu_custom_call.1} parent=95 // pred_check
          %p1834 = pneg %p527
        $region106: #{tpu_custom_call.1} parent=95 // pred_check_branch
          %1836 = sbr.rel (%p1834) target = $region108
        $region107: #{tpu_custom_call.1} parent=95 // pred_region
          %s1838 = ssub.s32 16, 16
          %1839 = vsyncadd %s1831, %s1838
          %s1840 = smul.addr %s37, 16
          %s1841 = scalar_lea.hbm %s19, %s1840
          %s1843 = sshll.u32 %s1833, 4
          %s1844 = int_to_ptr.vmem [resolvable:$true] %s1843
          %1846 = dma.vmem_to_hbm [thread:$0]  %s1844, 16, %s1841, %s1831
        $region108: #{tpu_custom_call.1} parent=95 // pred_fallthru
          _
      $region96: #{tpu_custom_call.1} parent=5 // pred_fallthru
        _
      %p1847 = scmp.le.s32.totalorder 2, %s28
      // Predicated region
      $region109: #{tpu_custom_call.1} parent=5 // pred_check
        %p1848 = pneg %p1847
      $region110: #{tpu_custom_call.1} parent=5 // pred_check_branch
        %1850 = sbr.rel (%p1848) target = $region112
      $region111: #{tpu_custom_call.1} parent=5 // pred_region
        %s1851 = ssub.s32 %s28, 2
        // Predicated region
        $region113: #{tpu_custom_call.1} parent=111 // pred_check
          %p1852 = pneg %p533
        $region114: #{tpu_custom_call.1} parent=111 // pred_check_branch
          %1854 = sbr.rel (%p1852) target = $region116
        $region115: #{tpu_custom_call.1} parent=111 // pred_region
          %s1855 = sand.u32 %s518, 1
          %s1856 = scalar_lea.sflag [#allocation5], %s1855
          %s1857 = sand.u32 %s518, 1
          %s1858 = scalar_lea.vmem [#allocation4], %s1857
          %1859 = dma.done %s1856, 16
        $region116: #{tpu_custom_call.1} parent=111 // pred_fallthru
          _
      $region112: #{tpu_custom_call.1} parent=5 // pred_fallthru
        _
    $region6: #{tpu_custom_call.1} parent=1 // loop_footer
      %s32 = sadd.s32 1, %s28
    $region7: #{tpu_custom_call.1} parent=1 // loop_footer_branch
      %27 = sbr.rel target = $region3
    $region8: #{tpu_custom_call.1} parent=1 // loop_exit
      _
    %1860 = vsyncpa [#allocation5], 1
    %s1861 = scalar_lea.sflag [#allocation5], 1
    %1862 = vsyncpa %s1861, 1

</llo_original>
